<compile_context>
chip_gen: v7x
topology: tpu7x:2x2x1
jax: 0.10.0
libtpu: 0.0.40
codegen_flags: <defaults>
</compile_context>

<pallas_src>
import functools

import jax
import jax.numpy as jnp
import numpy as np
from jax.experimental import pallas as pl
from jax.experimental.pallas import tpu as pltpu

BN_EPS = 1e-5                                                # torch BatchNorm1d default
CONV_CHANNELS, CONV_K, CONV_STRIDE, CONV_PAD = 64, 5, 1, 1   # conv_layers default
HEAD_MID = 64                                                # second Linear width
GROUP = 4   # conv timesteps packed per row -> K=128 per head-1 matmul
            # (fills v5e MXU depth; good on v6e; v7x could use 8 for K=256)


# ----------------------------------------------------------------------------
# Fused kernel: Conv1d -> BatchNorm1d(train stats) -> ReLU -> MaxPool1d(2)
#               -> all MLP heads (batched / block-diagonal GEMMs)
# ----------------------------------------------------------------------------
def fused_kernel(packed_ref, wcb_ref, w1_ref, w2_ref, w3_ref, vec_ref, out_ref,
                 *, batch, channels, group, n_blocks, num_heads, hidden,
                 head_mid, out_total):
    B, C, G = batch, channels, group
    half = (G // 2) * C                     # lanes per pooled half (=128 for G=4)

    # --- Conv1d as an im2col matmul against the pre-built G-block-diagonal
    # weight; the conv bias is folded in via the trailing ones column.
    conv = jnp.dot(packed_ref[...], wcb_ref[...],
                   preferred_element_type=jnp.float32)               # (rows, G*C)

    # --- BatchNorm1d training-mode (biased) batch stats in one pass.
    s1 = jnp.sum(conv, axis=0, keepdims=True)                        # (1, G*C)
    s2 = jnp.sum(conv * conv, axis=0, keepdims=True)                 # (1, G*C)
    mean = s1[:, :C]
    msq = s2[:, :C]
    for g in range(1, G):
        mean = mean + s1[:, g * C:(g + 1) * C]
        msq = msq + s2[:, g * C:(g + 1) * C]
    inv_n = 1.0 / (n_blocks * B * G)
    mean = mean * inv_n
    var = msq * inv_n - mean * mean

    # --- all small (1, N) operands live in one consolidated VMEM buffer.
    vec = vec_ref[...]
    gamma = vec[0:1, :C]
    beta = vec[1:2, :C]
    b1 = vec[2:3, :num_heads * hidden]
    b2 = vec[3:4, :num_heads * head_mid]
    b3 = vec[4:5, :out_total]

    scale = gamma * jax.lax.rsqrt(var + BN_EPS)                      # (1, C)
    shift = beta - mean * scale
    scale_f = jnp.concatenate([scale] * G, axis=1)                   # (1, G*C)
    shift_f = jnp.concatenate([shift] * G, axis=1)

    # --- BN affine + ReLU + MaxPool1d(2) fused: one affine pass over the full
    # tile, then a contiguous lane-slice max (even/odd timesteps sit in the
    # two lane halves) with the ReLU folded into the max.
    z = conv * scale_f + shift_f
    pooled = jnp.maximum(jnp.maximum(z[:, :half], z[:, half:]), 0.0)  # (rows, half)

    # --- dominant first Linear of every head, batched over heads along the
    # output dim and accumulated over row blocks (K = half per matmul).
    acc = jnp.zeros((B, num_heads * hidden), jnp.float32)
    for r in range(n_blocks):
        acc = acc + jnp.dot(pooled[r * B:(r + 1) * B, :],
                            w1_ref[r * half:(r + 1) * half, :],
                            preferred_element_type=jnp.float32)
    h1 = jnp.maximum(acc + b1, 0.0)                                   # (B, H*hidden)

    # --- tail MLPs of all heads as two block-diagonal GEMMs; the block-diag
    # w3 lands every head in one lane-contiguous output store.
    a2 = jnp.maximum(jnp.dot(h1, w2_ref[...],
                             preferred_element_type=jnp.float32) + b2, 0.0)
    out_ref[...] = jnp.dot(a2, w3_ref[...],
                           preferred_element_type=jnp.float32) + b3


# ----------------------------------------------------------------------------
# Parameter init (deterministic, synthetic, torch layouts)
# ----------------------------------------------------------------------------
def init_params(key, input_dim, output_dims, hidden_dim=128):
    t_out = (input_dim + 2 * CONV_PAD - CONV_K) // CONV_STRIDE + 1
    assert t_out % 2 == 0, "choose input_dim so the maxpool divides evenly"
    total_features = CONV_CHANNELS * (t_out // 2)

    keys = jax.random.split(key, 4 + 6 * len(output_dims))
    params = {
        "wc": 0.2 * jax.random.normal(keys[0], (CONV_CHANNELS, CONV_K), jnp.float32),
        "bc": 0.1 * jax.random.normal(keys[1], (1, CONV_CHANNELS), jnp.float32),
        "gamma": 1.0 + 0.1 * jax.random.normal(keys[2], (1, CONV_CHANNELS), jnp.float32),
        "beta": 0.1 * jax.random.normal(keys[3], (1, CONV_CHANNELS), jnp.float32),
        "heads": [],
    }
    ki = 4
    for od in output_dims:
        head = {
            "w1": (total_features ** -0.5)
                  * jax.random.normal(keys[ki + 0], (hidden_dim, total_features), jnp.float32),
            "b1": 0.05 * jax.random.normal(keys[ki + 1], (1, hidden_dim), jnp.float32),
            "w2": (hidden_dim ** -0.5)
                  * jax.random.normal(keys[ki + 2], (HEAD_MID, hidden_dim), jnp.float32),
            "b2": 0.05 * jax.random.normal(keys[ki + 3], (1, HEAD_MID), jnp.float32),
            "w3": (HEAD_MID ** -0.5)
                  * jax.random.normal(keys[ki + 4], (od, HEAD_MID), jnp.float32),
            "b3": 0.05 * jax.random.normal(keys[ki + 5], (1, od), jnp.float32),
        }
        params["heads"].append(head)
        ki += 6
    return params


# ----------------------------------------------------------------------------
# One-time weight repacking (HOISTED out of the jitted per-call path)
# ----------------------------------------------------------------------------
def pack_params(params, input_dim, group=GROUP):
    C, K = CONV_CHANNELS, CONV_K
    T = (input_dim + 2 * CONV_PAD - CONV_K) // CONV_STRIDE + 1
    assert group % 2 == 0 and T % group == 0, "conv length must divide by GROUP"
    Lp = T // 2
    heads = params["heads"]
    H = len(heads)
    hidden = int(heads[0]["w1"].shape[0])
    head_mid = int(heads[0]["w2"].shape[0])
    out_dims = tuple(int(hp["w3"].shape[0]) for hp in heads)
    od_total = sum(out_dims)

    # conv weight: G-block diagonal (pre-transposed) + bias row (consumed by
    # the ones column appended to the im2col patches).
    wcT = params["wc"].T                                             # (K, C)
    wc_blk = jnp.zeros((group * K + 1, group * C), jnp.float32)
    for g in range(group):
        wc_blk = wc_blk.at[g * K:(g + 1) * K, g * C:(g + 1) * C].set(wcT)
    wc_blk = wc_blk.at[group * K, :].set(jnp.tile(params["bc"][0], group))

    # w1: permute torch feature order (c*Lp + p) to the kernel's (p*C + c),
    # pre-transpose, concat all heads along the output dim.
    w1_cat = jnp.concatenate(
        [hp["w1"].reshape(hidden, C, Lp).transpose(2, 1, 0).reshape(Lp * C, hidden)
         for hp in heads], axis=1)                                   # (Lp*C, H*hidden)

    # w2 / w3: block-diagonal over heads, pre-transposed.
    w2_cat = jnp.zeros((H * hidden, H * head_mid), jnp.float32)
    for h, hp in enumerate(heads):
        w2_cat = w2_cat.at[h * hidden:(h + 1) * hidden,
                           h * head_mid:(h + 1) * head_mid].set(hp["w2"].T)
    w3_cat = jnp.zeros((H * head_mid, od_total), jnp.float32)
    off = 0
    for h, hp in enumerate(heads):
        od = out_dims[h]
        w3_cat = w3_cat.at[h * head_mid:(h + 1) * head_mid,
                           off:off + od].set(hp["w3"].T)
        off += od

    # consolidate all small (1, N) operands into one VMEM buffer (one DMA).
    vec_w = max(C, H * hidden, H * head_mid, od_total)
    vec_w = ((vec_w + 127) // 128) * 128
    b1_cat = jnp.concatenate([hp["b1"] for hp in heads], axis=1)[0]
    b2_cat = jnp.concatenate([hp["b2"] for hp in heads], axis=1)[0]
    b3_cat = jnp.concatenate([hp["b3"] for hp in heads], axis=1)[0]
    vec = jnp.zeros((8, vec_w), jnp.float32)
    vec = vec.at[0, :C].set(params["gamma"][0])
    vec = vec.at[1, :C].set(params["beta"][0])
    vec = vec.at[2, :H * hidden].set(b1_cat)
    vec = vec.at[3, :H * head_mid].set(b2_cat)
    vec = vec.at[4, :od_total].set(b3_cat)

    packed = {"wc_blk": wc_blk, "w1": w1_cat, "w2": w2_cat, "w3": w3_cat, "vec": vec}
    meta = {"out_dims": out_dims, "hidden": hidden, "head_mid": head_mid,
            "group": group}
    return packed, meta


# ----------------------------------------------------------------------------
# Jitted hot path: per-input im2col + single fused pallas_call
# ----------------------------------------------------------------------------
def forward(packed, x, *, out_dims, hidden, head_mid, group):
    B, L = x.shape
    assert B % 8 == 0, "batch must be a multiple of 8 (sublane-tile alignment)"
    T = (L + 2 * CONV_PAD - CONV_K) // CONV_STRIDE + 1
    assert T % group == 0
    C = CONV_CHANNELS
    n_blocks = T // group
    Lp = T // 2
    num_heads = len(out_dims)
    od_total = sum(out_dims)

    # im2col patches, GROUP timesteps per row, even-timestep blocks first then
    # odd-timestep blocks (so MaxPool1d(2) becomes a contiguous lane-slice
    # max), plus a trailing ones column that folds in the conv bias.
    xpad = jnp.pad(x, ((0, 0), (CONV_PAD, CONV_PAD)))
    patches = jnp.stack([xpad[:, k:k + T] for k in range(CONV_K)], axis=-1)  # (B,T,K)
    pg = patches.reshape(B, n_blocks, group, CONV_K)
    pg = jnp.concatenate([pg[:, :, 0::2, :], pg[:, :, 1::2, :]], axis=2)
    pg = pg.reshape(B, n_blocks, group * CONV_K)
    pg = jnp.concatenate([pg, jnp.ones((B, n_blocks, 1), pg.dtype)], axis=-1)
    packed_x = pg.transpose(1, 0, 2).reshape(n_blocks * B, group * CONV_K + 1)

    kernel = functools.partial(
        fused_kernel, batch=B, channels=C, group=group, n_blocks=n_blocks,
        num_heads=num_heads, hidden=hidden, head_mid=head_mid,
        out_total=od_total)

    flops = 2 * (packed_x.shape[0] * packed_x.shape[1] * group * C
                 + B * Lp * C * num_heads * hidden
                 + B * num_heads * hidden * num_heads * head_mid
                 + B * num_heads * head_mid * od_total)
    bytes_accessed = 4 * (packed_x.size + packed["wc_blk"].size + packed["w1"].size
                          + packed["w2"].size + packed["w3"].size
                          + packed["vec"].size + B * od_total)

    out = pl.pallas_call(
        kernel,
        out_shape=jax.ShapeDtypeStruct((B, od_total), jnp.float32),
        in_specs=[pl.BlockSpec(memory_space=pltpu.MemorySpace.VMEM)] * 6,
        out_specs=pl.BlockSpec(memory_space=pltpu.MemorySpace.VMEM),
        cost_estimate=pl.CostEstimate(flops=int(flops), transcendentals=C,
                                      bytes_accessed=int(bytes_accessed)),
    )(packed_x, packed["wc_blk"], packed["w1"], packed["w2"], packed["w3"],
      packed["vec"])

    # slice the concatenated output back into per-task outputs
    outs, off = [], 0
    for od in out_dims:
        outs.append(out[:, off:off + od])
        off += od
    return outs


# Pure-JAX reference mirroring torch semantics (correctness check).
def reference(params, x):
    B, L = x.shape
    T = L + 2 * CONV_PAD - CONV_K + 1
    xpad = jnp.pad(x, ((0, 0), (CONV_PAD, CONV_PAD)))
    patches = jnp.stack([xpad[:, k:k + T] for k in range(CONV_K)], axis=-1)  # (B,T,K)
    conv = jnp.einsum("btk,ck->bct", patches, params["wc"]) \
        + params["bc"].reshape(1, -1, 1)
    mean = conv.mean(axis=(0, 2), keepdims=True)
    var = ((conv - mean) ** 2).mean(axis=(0, 2), keepdims=True)
    bn = (conv - mean) / jnp.sqrt(var + BN_EPS) * params["gamma"].reshape(1, -1, 1) \
        + params["beta"].reshape(1, -1, 1)
    act = jnp.maximum(bn, 0.0)
    pooled = jnp.max(act.reshape(B, CONV_CHANNELS, T // 2, 2), axis=-1)
    feat = pooled.reshape(B, -1)
    outs = []
    for hp in params["heads"]:
        h = jnp.maximum(feat @ hp["w1"].T + hp["b1"][0], 0.0)
        h = jnp.maximum(h @ hp["w2"].T + hp["b2"][0], 0.0)
        outs.append(h @ hp["w3"].T + hp["b3"][0])
    return outs


if __name__ == "__main__":
    key = jax.random.PRNGKey(0)
    kx, kp = jax.random.split(key)

    B, input_dim = 8, 34          # conv out len 32, pooled 16 -> 1024 features
    output_dims = [3, 5]          # two task heads

    x = jax.random.normal(kx, (B, input_dim), jnp.float32)
    params = init_params(kp, input_dim, output_dims, hidden_dim=128)

    # weight repacking runs ONCE here, outside the jitted per-call path.
    packed, meta = pack_params(params, input_dim)
    packed = {k: jax.block_until_ready(v) for k, v in packed.items()}

    fwd = jax.jit(functools.partial(
        forward, out_dims=meta["out_dims"], hidden=meta["hidden"],
        head_mid=meta["head_mid"], group=meta["group"]))

    outs = fwd(packed, x)
    outs = [jax.block_until_ready(o) for o in outs]

    refs = reference(params, x)
    for o, r in zip(outs, refs):
        np.testing.assert_allclose(np.asarray(o), np.asarray(r),
                                   rtol=2e-4, atol=2e-4)
    print("KERNEL_OK")
</pallas_src>

<mosaic_0001>
module attributes {stable_mosaic.version = 11 : i64} {
  func.func @fused_kernel(%arg0: memref<64x21xf32, #tpu.memory_space<vmem>>, %arg1: memref<21x256xf32, #tpu.memory_space<vmem>>, %arg2: memref<1024x256xf32, #tpu.memory_space<vmem>>, %arg3: memref<256x128xf32, #tpu.memory_space<vmem>>, %arg4: memref<128x8xf32, #tpu.memory_space<vmem>>, %arg5: memref<8x256xf32, #tpu.memory_space<vmem>>, %arg6: memref<8x8xf32, #tpu.memory_space<vmem>>) attributes {dimension_semantics = [], scalar_prefetch = 0 : i64, scratch_operands = 0 : i64, tpu.core_type = #tpu.core_type<tc>} {
    %c0 = arith.constant 0 : index
    %c0_0 = arith.constant 0 : index
    %0 = vector.load %arg0[%c0, %c0_0] : memref<64x21xf32, #tpu.memory_space<vmem>>, vector<64x21xf32>
    %c0_1 = arith.constant 0 : index
    %c0_2 = arith.constant 0 : index
    %1 = vector.load %arg1[%c0_1, %c0_2] : memref<21x256xf32, #tpu.memory_space<vmem>>, vector<21x256xf32>
    %cst = arith.constant dense<0.000000e+00> : vector<64x256xf32>
    %2 = tpu.matmul %0, %1, %cst {dimension_numbers = #tpu.dot_dimension_numbers<[1], [0], [0], [1], [0, 0, 1, 1], [], []>} : vector<64x21xf32>, vector<21x256xf32>, vector<64x256xf32> -> vector<64x256xf32>
    %cst_3 = arith.constant dense<0.000000e+00> : vector<256xf32>
    %3 = vector.multi_reduction <add>, %2, %cst_3 [0] : vector<64x256xf32> to vector<256xf32>
    %4 = vector.shape_cast %3 : vector<256xf32> to vector<1x256xf32>
    %5 = arith.mulf %2, %2 : vector<64x256xf32>
    %cst_4 = arith.constant dense<0.000000e+00> : vector<256xf32>
    %6 = vector.multi_reduction <add>, %5, %cst_4 [0] : vector<64x256xf32> to vector<256xf32>
    %7 = vector.shape_cast %6 : vector<256xf32> to vector<1x256xf32>
    %8 = vector.extract_strided_slice %4 {offsets = [0, 0], sizes = [1, 64], strides = [1, 1]} : vector<1x256xf32> to vector<1x64xf32>
    %9 = vector.extract_strided_slice %7 {offsets = [0, 0], sizes = [1, 64], strides = [1, 1]} : vector<1x256xf32> to vector<1x64xf32>
    %10 = vector.extract_strided_slice %4 {offsets = [0, 64], sizes = [1, 64], strides = [1, 1]} : vector<1x256xf32> to vector<1x64xf32>
    %11 = arith.addf %8, %10 : vector<1x64xf32>
    %12 = vector.extract_strided_slice %7 {offsets = [0, 64], sizes = [1, 64], strides = [1, 1]} : vector<1x256xf32> to vector<1x64xf32>
    %13 = arith.addf %9, %12 : vector<1x64xf32>
    %14 = vector.extract_strided_slice %4 {offsets = [0, 128], sizes = [1, 64], strides = [1, 1]} : vector<1x256xf32> to vector<1x64xf32>
    %15 = arith.addf %11, %14 : vector<1x64xf32>
    %16 = vector.extract_strided_slice %7 {offsets = [0, 128], sizes = [1, 64], strides = [1, 1]} : vector<1x256xf32> to vector<1x64xf32>
    %17 = arith.addf %13, %16 : vector<1x64xf32>
    %18 = vector.extract_strided_slice %4 {offsets = [0, 192], sizes = [1, 64], strides = [1, 1]} : vector<1x256xf32> to vector<1x64xf32>
    %19 = arith.addf %15, %18 : vector<1x64xf32>
    %20 = vector.extract_strided_slice %7 {offsets = [0, 192], sizes = [1, 64], strides = [1, 1]} : vector<1x256xf32> to vector<1x64xf32>
    %21 = arith.addf %17, %20 : vector<1x64xf32>
    %cst_5 = arith.constant 3.906250e-03 : f32
    %22 = vector.broadcast %cst_5 : f32 to vector<1x64xf32>
    %23 = arith.mulf %19, %22 : vector<1x64xf32>
    %cst_6 = arith.constant 3.906250e-03 : f32
    %24 = vector.broadcast %cst_6 : f32 to vector<1x64xf32>
    %25 = arith.mulf %21, %24 : vector<1x64xf32>
    %26 = arith.mulf %23, %23 : vector<1x64xf32>
    %27 = arith.subf %25, %26 : vector<1x64xf32>
    %c0_7 = arith.constant 0 : index
    %c0_8 = arith.constant 0 : index
    %28 = vector.load %arg5[%c0_7, %c0_8] : memref<8x256xf32, #tpu.memory_space<vmem>>, vector<8x256xf32>
    %29 = vector.extract_strided_slice %28 {offsets = [0, 0], sizes = [1, 64], strides = [1, 1]} : vector<8x256xf32> to vector<1x64xf32>
    %30 = vector.extract_strided_slice %28 {offsets = [1, 0], sizes = [1, 64], strides = [1, 1]} : vector<8x256xf32> to vector<1x64xf32>
    %31 = vector.extract_strided_slice %28 {offsets = [2, 0], sizes = [1, 256], strides = [1, 1]} : vector<8x256xf32> to vector<1x256xf32>
    %32 = vector.extract_strided_slice %28 {offsets = [3, 0], sizes = [1, 128], strides = [1, 1]} : vector<8x256xf32> to vector<1x128xf32>
    %33 = vector.extract_strided_slice %28 {offsets = [4, 0], sizes = [1, 8], strides = [1, 1]} : vector<8x256xf32> to vector<1x8xf32>
    %cst_9 = arith.constant 9.99999974E-6 : f32
    %34 = vector.broadcast %cst_9 : f32 to vector<1x64xf32>
    %35 = arith.addf %27, %34 : vector<1x64xf32>
    %36 = math.rsqrt %35 : vector<1x64xf32>
    %37 = arith.mulf %29, %36 : vector<1x64xf32>
    %38 = arith.mulf %23, %37 : vector<1x64xf32>
    %39 = arith.subf %30, %38 : vector<1x64xf32>
    %40 = tpu.concatenate %37, %37, %37, %37 in 1 : vector<1x64xf32>, vector<1x64xf32>, vector<1x64xf32>, vector<1x64xf32> -> vector<1x256xf32>
    %41 = tpu.concatenate %39, %39, %39, %39 in 1 : vector<1x64xf32>, vector<1x64xf32>, vector<1x64xf32>, vector<1x64xf32> -> vector<1x256xf32>
    %42 = vector.broadcast %40 : vector<1x256xf32> to vector<64x256xf32>
    %43 = arith.mulf %2, %42 : vector<64x256xf32>
    %44 = vector.broadcast %41 : vector<1x256xf32> to vector<64x256xf32>
    %45 = arith.addf %43, %44 : vector<64x256xf32>
    %46 = vector.extract_strided_slice %45 {offsets = [0, 0], sizes = [64, 128], strides = [1, 1]} : vector<64x256xf32> to vector<64x128xf32>
    %47 = vector.extract_strided_slice %45 {offsets = [0, 128], sizes = [64, 128], strides = [1, 1]} : vector<64x256xf32> to vector<64x128xf32>
    %48 = arith.maximumf %46, %47 : vector<64x128xf32>
    %cst_10 = arith.constant 0.000000e+00 : f32
    %49 = vector.broadcast %cst_10 : f32 to vector<64x128xf32>
    %50 = arith.maximumf %48, %49 : vector<64x128xf32>
    %cst_11 = arith.constant 0.000000e+00 : f32
    %51 = vector.broadcast %cst_11 : f32 to vector<8x256xf32>
    %52 = vector.extract_strided_slice %50 {offsets = [0, 0], sizes = [8, 128], strides = [1, 1]} : vector<64x128xf32> to vector<8x128xf32>
    %c0_12 = arith.constant 0 : index
    %c0_13 = arith.constant 0 : index
    %53 = vector.load %arg2[%c0_12, %c0_13] : memref<1024x256xf32, #tpu.memory_space<vmem>>, vector<128x256xf32>
    %cst_14 = arith.constant dense<0.000000e+00> : vector<8x256xf32>
    %54 = tpu.matmul %52, %53, %cst_14 {dimension_numbers = #tpu.dot_dimension_numbers<[1], [0], [0], [1], [0, 0, 1, 1], [], []>} : vector<8x128xf32>, vector<128x256xf32>, vector<8x256xf32> -> vector<8x256xf32>
    %55 = arith.addf %51, %54 : vector<8x256xf32>
    %56 = vector.extract_strided_slice %50 {offsets = [8, 0], sizes = [8, 128], strides = [1, 1]} : vector<64x128xf32> to vector<8x128xf32>
    %c128 = arith.constant 128 : index
    %c0_15 = arith.constant 0 : index
    %57 = vector.load %arg2[%c128, %c0_15] : memref<1024x256xf32, #tpu.memory_space<vmem>>, vector<128x256xf32>
    %cst_16 = arith.constant dense<0.000000e+00> : vector<8x256xf32>
    %58 = tpu.matmul %56, %57, %cst_16 {dimension_numbers = #tpu.dot_dimension_numbers<[1], [0], [0], [1], [0, 0, 1, 1], [], []>} : vector<8x128xf32>, vector<128x256xf32>, vector<8x256xf32> -> vector<8x256xf32>
    %59 = arith.addf %55, %58 : vector<8x256xf32>
    %60 = vector.extract_strided_slice %50 {offsets = [16, 0], sizes = [8, 128], strides = [1, 1]} : vector<64x128xf32> to vector<8x128xf32>
    %c256 = arith.constant 256 : index
    %c0_17 = arith.constant 0 : index
    %61 = vector.load %arg2[%c256, %c0_17] : memref<1024x256xf32, #tpu.memory_space<vmem>>, vector<128x256xf32>
    %cst_18 = arith.constant dense<0.000000e+00> : vector<8x256xf32>
    %62 = tpu.matmul %60, %61, %cst_18 {dimension_numbers = #tpu.dot_dimension_numbers<[1], [0], [0], [1], [0, 0, 1, 1], [], []>} : vector<8x128xf32>, vector<128x256xf32>, vector<8x256xf32> -> vector<8x256xf32>
    %63 = arith.addf %59, %62 : vector<8x256xf32>
    %64 = vector.extract_strided_slice %50 {offsets = [24, 0], sizes = [8, 128], strides = [1, 1]} : vector<64x128xf32> to vector<8x128xf32>
    %c384 = arith.constant 384 : index
    %c0_19 = arith.constant 0 : index
    %65 = vector.load %arg2[%c384, %c0_19] : memref<1024x256xf32, #tpu.memory_space<vmem>>, vector<128x256xf32>
    %cst_20 = arith.constant dense<0.000000e+00> : vector<8x256xf32>
    %66 = tpu.matmul %64, %65, %cst_20 {dimension_numbers = #tpu.dot_dimension_numbers<[1], [0], [0], [1], [0, 0, 1, 1], [], []>} : vector<8x128xf32>, vector<128x256xf32>, vector<8x256xf32> -> vector<8x256xf32>
    %67 = arith.addf %63, %66 : vector<8x256xf32>
    %68 = vector.extract_strided_slice %50 {offsets = [32, 0], sizes = [8, 128], strides = [1, 1]} : vector<64x128xf32> to vector<8x128xf32>
    %c512 = arith.constant 512 : index
    %c0_21 = arith.constant 0 : index
    %69 = vector.load %arg2[%c512, %c0_21] : memref<1024x256xf32, #tpu.memory_space<vmem>>, vector<128x256xf32>
    %cst_22 = arith.constant dense<0.000000e+00> : vector<8x256xf32>
    %70 = tpu.matmul %68, %69, %cst_22 {dimension_numbers = #tpu.dot_dimension_numbers<[1], [0], [0], [1], [0, 0, 1, 1], [], []>} : vector<8x128xf32>, vector<128x256xf32>, vector<8x256xf32> -> vector<8x256xf32>
    %71 = arith.addf %67, %70 : vector<8x256xf32>
    %72 = vector.extract_strided_slice %50 {offsets = [40, 0], sizes = [8, 128], strides = [1, 1]} : vector<64x128xf32> to vector<8x128xf32>
    %c640 = arith.constant 640 : index
    %c0_23 = arith.constant 0 : index
    %73 = vector.load %arg2[%c640, %c0_23] : memref<1024x256xf32, #tpu.memory_space<vmem>>, vector<128x256xf32>
    %cst_24 = arith.constant dense<0.000000e+00> : vector<8x256xf32>
    %74 = tpu.matmul %72, %73, %cst_24 {dimension_numbers = #tpu.dot_dimension_numbers<[1], [0], [0], [1], [0, 0, 1, 1], [], []>} : vector<8x128xf32>, vector<128x256xf32>, vector<8x256xf32> -> vector<8x256xf32>
    %75 = arith.addf %71, %74 : vector<8x256xf32>
    %76 = vector.extract_strided_slice %50 {offsets = [48, 0], sizes = [8, 128], strides = [1, 1]} : vector<64x128xf32> to vector<8x128xf32>
    %c768 = arith.constant 768 : index
    %c0_25 = arith.constant 0 : index
    %77 = vector.load %arg2[%c768, %c0_25] : memref<1024x256xf32, #tpu.memory_space<vmem>>, vector<128x256xf32>
    %cst_26 = arith.constant dense<0.000000e+00> : vector<8x256xf32>
    %78 = tpu.matmul %76, %77, %cst_26 {dimension_numbers = #tpu.dot_dimension_numbers<[1], [0], [0], [1], [0, 0, 1, 1], [], []>} : vector<8x128xf32>, vector<128x256xf32>, vector<8x256xf32> -> vector<8x256xf32>
    %79 = arith.addf %75, %78 : vector<8x256xf32>
    %80 = vector.extract_strided_slice %50 {offsets = [56, 0], sizes = [8, 128], strides = [1, 1]} : vector<64x128xf32> to vector<8x128xf32>
    %c896 = arith.constant 896 : index
    %c0_27 = arith.constant 0 : index
    %81 = vector.load %arg2[%c896, %c0_27] : memref<1024x256xf32, #tpu.memory_space<vmem>>, vector<128x256xf32>
    %cst_28 = arith.constant dense<0.000000e+00> : vector<8x256xf32>
    %82 = tpu.matmul %80, %81, %cst_28 {dimension_numbers = #tpu.dot_dimension_numbers<[1], [0], [0], [1], [0, 0, 1, 1], [], []>} : vector<8x128xf32>, vector<128x256xf32>, vector<8x256xf32> -> vector<8x256xf32>
    %83 = arith.addf %79, %82 : vector<8x256xf32>
    %84 = vector.broadcast %31 : vector<1x256xf32> to vector<8x256xf32>
    %85 = arith.addf %83, %84 : vector<8x256xf32>
    %cst_29 = arith.constant 0.000000e+00 : f32
    %86 = vector.broadcast %cst_29 : f32 to vector<8x256xf32>
    %87 = arith.maximumf %85, %86 : vector<8x256xf32>
    %c0_30 = arith.constant 0 : index
    %c0_31 = arith.constant 0 : index
    %88 = vector.load %arg3[%c0_30, %c0_31] : memref<256x128xf32, #tpu.memory_space<vmem>>, vector<256x128xf32>
    %cst_32 = arith.constant dense<0.000000e+00> : vector<8x128xf32>
    %89 = tpu.matmul %87, %88, %cst_32 {dimension_numbers = #tpu.dot_dimension_numbers<[1], [0], [0], [1], [0, 0, 1, 1], [], []>} : vector<8x256xf32>, vector<256x128xf32>, vector<8x128xf32> -> vector<8x128xf32>
    %90 = vector.broadcast %32 : vector<1x128xf32> to vector<8x128xf32>
    %91 = arith.addf %89, %90 : vector<8x128xf32>
    %cst_33 = arith.constant 0.000000e+00 : f32
    %92 = vector.broadcast %cst_33 : f32 to vector<8x128xf32>
    %93 = arith.maximumf %91, %92 : vector<8x128xf32>
    %c0_34 = arith.constant 0 : index
    %c0_35 = arith.constant 0 : index
    %94 = vector.load %arg4[%c0_34, %c0_35] : memref<128x8xf32, #tpu.memory_space<vmem>>, vector<128x8xf32>
    %cst_36 = arith.constant dense<0.000000e+00> : vector<8x8xf32>
    %95 = tpu.matmul %93, %94, %cst_36 {dimension_numbers = #tpu.dot_dimension_numbers<[1], [0], [0], [1], [0, 0, 1, 1], [], []>} : vector<8x128xf32>, vector<128x8xf32>, vector<8x8xf32> -> vector<8x8xf32>
    %96 = vector.broadcast %33 : vector<1x8xf32> to vector<8x8xf32>
    %97 = arith.addf %95, %96 : vector<8x8xf32>
    %c0_37 = arith.constant 0 : index
    %c0_38 = arith.constant 0 : index
    %98 = vector.load %arg6[%c0_37, %c0_38] : memref<8x8xf32, #tpu.memory_space<vmem>>, vector<8x8xf32>
    tpu.vector_store %arg6[%c0_37, %c0_38], %97 {strides = array<i32>} : memref<8x8xf32, #tpu.memory_space<vmem>>, vector<8x8xf32>,
    return
  }
}

</mosaic_0001>

<llo_original>
// kernel: forward.1
$region0: #{forward.1}
  #allocation0 [shape = 'u32[]', space=smem, size = 0x4, offset = 0x4, fixed_abs, tag = 'smem constant byte address 0x4 - core index']
  #allocation1 [shape = 'u32[144,128]{1,0:T(1,128)}', space=vmem, size = 0x12000, scoped, tag = 'internal scratch']
  %s0 = inlined_call_operand.vmem [shape: f32[64,21], index: 0, kind: input, shape index: {}]
  %s1 = inlined_call_operand.vmem [shape: f32[21,256], index: 1, kind: input, shape index: {}]
  %s2 = inlined_call_operand.vmem [shape: f32[1024,256], index: 2, kind: input, shape index: {}]
  %s3 = inlined_call_operand.vmem [shape: f32[256,128], index: 3, kind: input, shape index: {}]
  %s4 = inlined_call_operand.vmem [shape: f32[128,8], index: 4, kind: input, shape index: {}]
  %s5 = inlined_call_operand.vmem [shape: f32[8,256], index: 5, kind: input, shape index: {}]
  %s6 = inlined_call_operand.vmem [shape: f32[8,8], index: 6, kind: output, shape index: {}]
  %s7 = sld [smem:[#allocation0]]
  $region34: #{forward.1} parent=0
    _
  %s9 = ssub.s32 1, %s7
  %s10 = scalar_select 0, %s9, %s7
  // Predicated region
  $region2: #{forward.1} parent=0 // pred_check
    _
  $region3: #{forward.1} parent=0 // pred_check_branch
    %12 = sbr.rel (0) target = $region5
  $region4: #{forward.1} parent=0 // pred_region
    _
  $region5: #{forward.1} parent=0 // pred_fallthru
    _
  // Predicated region
  $region6: #{forward.1} parent=0 // pred_check
    _
  $region7: #{forward.1} parent=0 // pred_check_branch
    %14 = sbr.rel (0) target = $region9
  $region8: #{forward.1} parent=0 // pred_region
    _
  $region9: #{forward.1} parent=0 // pred_fallthru
    _
  // Predicated region
  $region10: #{forward.1} parent=0 // pred_check
    _
  $region11: #{forward.1} parent=0 // pred_check_branch
    %16 = sbr.rel (0) target = $region13
  $region12: #{forward.1} parent=0 // pred_region
    _
  $region13: #{forward.1} parent=0 // pred_fallthru
    _
  // Predicated region
  $region14: #{forward.1} parent=0 // pred_check
    _
  $region15: #{forward.1} parent=0 // pred_check_branch
    %18 = sbr.rel (0) target = $region17
  $region16: #{forward.1} parent=0 // pred_region
    _
  $region17: #{forward.1} parent=0 // pred_fallthru
    _
  // Predicated region
  $region18: #{forward.1} parent=0 // pred_check
    _
  $region19: #{forward.1} parent=0 // pred_check_branch
    %20 = sbr.rel (0) target = $region21
  $region20: #{forward.1} parent=0 // pred_region
    _
  $region21: #{forward.1} parent=0 // pred_fallthru
    _
  // Predicated region
  $region22: #{forward.1} parent=0 // pred_check
    _
  $region23: #{forward.1} parent=0 // pred_check_branch
    %22 = sbr.rel (0) target = $region25
  $region24: #{forward.1} parent=0 // pred_region
    _
  $region25: #{forward.1} parent=0 // pred_fallthru
    _
  %v23 = vld [vmem:[%s0] sm:$0xff]
  %v24 = vld [vmem:[%s0 + $0x8] sm:$0xff]
  %v25 = vld [vmem:[%s0 + $0x10] sm:$0xff]
  %v26 = vld [vmem:[%s0 + $0x18] sm:$0xff]
  %v27 = vld [vmem:[%s0 + $0x20] sm:$0xff]
  %v28 = vld [vmem:[%s0 + $0x28] sm:$0xff]
  %v29 = vld [vmem:[%s0 + $0x30] sm:$0xff]
  %v30 = vld [vmem:[%s0 + $0x38] sm:$0xff]
  %v31 = vld [vmem:[%s1] sm:$0xff]
  %v32 = vld [vmem:[%s1 + $0x8] sm:$0xff]
  %v33 = vld [vmem:[%s1 + $0x10] sm:$0xff]
  %v34 = vld [vmem:[%s1 + $0x18] sm:$0xff]
  %v35 = vld [vmem:[%s1 + $0x20] sm:$0x1f]
  %v36 = vld [vmem:[%s1 + $0x28] sm:$0x1f]
  %vm37 = vcmask 171008
  %v39 = vsel %vm37, %v23, 0
  %v42 = vsel %vm37, %v24, 0
  %v45 = vsel %vm37, %v25, 0
  %v48 = vsel %vm37, %v26, 0
  %v51 = vsel %vm37, %v27, 0
  %v54 = vsel %vm37, %v28, 0
  %v57 = vsel %vm37, %v29, 0
  %v60 = vsel %vm37, %v30, 0
  %vm62 = vcmask 1044480
  %v64 = vsel %vm62, %v35, 0
  %v67 = vsel %vm62, %v36, 0
  %69 = vmatprep.subr.mxu0 %v32
  %70 = vmatpush1.msra.mxu0 %v31
  %71 = vmatprep.subr.mxu0 %v34
  %72 = vmatpush1.msra.mxu0 %v33
  %73 = vmatprep.subr.mxu0 %v67
  %74 = vmatpush1.msra.mxu0 %v64
  %75 = vmatprep.subr.mxu0 0.0
  %76 = vmatpush1.msra.mxu0 0.0
  %77 = vmatprep.subr.mxu0 0.0
  %78 = vmatpush1.msra.mxu0 0.0
  %79 = vmatprep.subr.mxu0 0.0
  %80 = vmatpush1.msra.mxu0 0.0
  %81 = vmatprep.subr.mxu0 0.0
  %82 = vmatpush1.msra.mxu0 0.0
  %83 = vmatprep.subr.mxu0 0.0
  %84 = vmatpush1.msra.mxu0 0.0
  %85 = vmatprep.subr.mxu0 0.0
  %86 = vmatpush1.msra.mxu0 0.0
  %87 = vmatprep.subr.mxu0 0.0
  %88 = vmatpush1.msra.mxu0 0.0
  %89 = vmatprep.subr.mxu0 0.0
  %90 = vmatpush1.msra.mxu0 0.0
  %91 = vmatprep.subr.mxu0 0.0
  %92 = vmatpush1.msra.mxu0 0.0
  %93 = vmatprep.subr.mxu0 0.0
  %94 = vmatpush1.msra.mxu0 0.0
  %95 = vmatprep.subr.mxu0 0.0
  %96 = vmatpush1.msra.mxu0 0.0
  %97 = vmatprep.subr.mxu0 0.0
  %98 = vmatpush1.msra.mxu0 0.0
  %99 = vmatprep.subr.mxu0 0.0
  %100 = vmatpush1.msra.mxu0 0.0
  %101 = vmatprep.subr.mxu0 0.0
  %102 = vmatpush1.msra.mxu0 0.0
  %103 = vmatprep.subr.mxu0 0.0
  %104 = vmatpush1.msra.mxu0 0.0
  %105 = vmatprep.subr.mxu0 0.0
  %106 = vmatpush1.msra.mxu0 0.0
  %107 = vmatprep.subr.mxu0 0.0
  %108 = vmatpush1.msra.mxu0 0.0
  %109 = vmatprep.subr.mxu0 0.0
  %110 = vmatpush1.msra.mxu0 0.0
  %111 = vmatprep.subr.mxu0 0.0
  %112 = vmatpush1.msra.mxu0 0.0
  %113 = vmatprep.subr.mxu0 0.0
  %114 = vmatpush1.msra.mxu0 0.0
  %115 = vmatprep.subr.mxu0 0.0
  %116 = vmatpush1.msra.mxu0 0.0
  %117 = vmatprep.subr.mxu0 0.0
  %118 = vmatpush1.msra.mxu0 0.0
  %119 = vmatprep.subr.mxu0 0.0
  %120 = vmatpush1.msra.mxu0 0.0
  %121 = vmatprep.subr.mxu0 0.0
  %122 = vmatpush1.msra.mxu0 0.0
  %123 = vmatprep.subr.mxu0 0.0
  %124 = vmatpush1.msra.mxu0 0.0
  %125 = vmatprep.subr.mxu0 0.0
  %126 = vmatpush1.msra.mxu0 0.0
  %127 = vmatprep.subr.mxu0 0.0
  %128 = vmatpush1.msra.mxu0 0.0
  %129 = vmatprep.subr.mxu0 0.0
  %130 = vmatpush1.msra.mxu0 0.0
  %131 = vmatprep.subr.mxu0 0.0
  %132 = vmatpush1.msra.mxu0 0.0
  %133 = vmatprep.mubr.f32.mxu0 0.0
  %134 = vmatmul.mubr.f32.gmra.mrb[0].mxu0 %v39
  %v135 = vpop.f32.mrb[0].mxu0
  %v136 = vadd.f32 0.0, %v135
  %v137 = vpop.f32.mrb[0].mxu0
  %v138 = vadd.f32 0.0, %v137
  %139 = vmatprep.mubr.f32.mxu0 0.0
  %140 = vmatmul.mubr.f32.gmra.mrb[0].mxu0 %v42
  %v141 = vpop.f32.mrb[0].mxu0
  %v142 = vadd.f32 0.0, %v141
  %v143 = vpop.f32.mrb[0].mxu0
  %v144 = vadd.f32 0.0, %v143
  %145 = vmatprep.mubr.f32.mxu0 0.0
  %146 = vmatmul.mubr.f32.gmra.mrb[0].mxu0 %v45
  %v147 = vpop.f32.mrb[0].mxu0
  %v148 = vadd.f32 0.0, %v147
  %v149 = vpop.f32.mrb[0].mxu0
  %v150 = vadd.f32 0.0, %v149
  %151 = vmatprep.mubr.f32.mxu0 0.0
  %152 = vmatmul.mubr.f32.gmra.mrb[0].mxu0 %v48
  %v153 = vpop.f32.mrb[0].mxu0
  %v154 = vadd.f32 0.0, %v153
  %v155 = vpop.f32.mrb[0].mxu0
  %v156 = vadd.f32 0.0, %v155
  %157 = vmatprep.mubr.f32.mxu0 0.0
  %158 = vmatmul.mubr.f32.gmra.mrb[0].mxu0 %v51
  %v159 = vpop.f32.mrb[0].mxu0
  %v160 = vadd.f32 0.0, %v159
  %v161 = vpop.f32.mrb[0].mxu0
  %v162 = vadd.f32 0.0, %v161
  %163 = vmatprep.mubr.f32.mxu0 0.0
  %164 = vmatmul.mubr.f32.gmra.mrb[0].mxu0 %v54
  %v165 = vpop.f32.mrb[0].mxu0
  %v166 = vadd.f32 0.0, %v165
  %v167 = vpop.f32.mrb[0].mxu0
  %v168 = vadd.f32 0.0, %v167
  %169 = vmatprep.mubr.f32.mxu0 0.0
  %170 = vmatmul.mubr.f32.gmra.mrb[0].mxu0 %v57
  %v171 = vpop.f32.mrb[0].mxu0
  %v172 = vadd.f32 0.0, %v171
  %v173 = vpop.f32.mrb[0].mxu0
  %v174 = vadd.f32 0.0, %v173
  %175 = vmatprep.mubr.f32.mxu0 0.0
  %176 = vmatmul.mubr.f32.gmra.mrb[0].mxu0 %v60
  %v177 = vpop.f32.mrb[0].mxu0
  %v178 = vadd.f32 0.0, %v177
  %v179 = vpop.f32.mrb[0].mxu0
  %v180 = vadd.f32 0.0, %v179
  %181 = vdwg.mxu0
  %v182 = vadd.f32 %v136, %v142
  %v183 = vadd.f32 %v182, %v148
  %v184 = vadd.f32 %v183, %v154
  %v185 = vadd.f32 %v184, %v160
  %v186 = vadd.f32 %v185, %v166
  %v187 = vadd.f32 %v186, %v172
  %v188 = vadd.f32 %v187, %v178
  %v189 = vrot.slane %v188, 4
  %v190 = vadd.f32 %v188, %v189
  %v191 = vrot.slane %v190, 2
  %v192 = vadd.f32 %v190, %v191
  %v193 = vrot.slane %v192, 1
  %v194 = vadd.f32 %v192, %v193
  %v195 = vadd.f32 %v138, %v144
  %v196 = vadd.f32 %v195, %v150
  %v197 = vadd.f32 %v196, %v156
  %v198 = vadd.f32 %v197, %v162
  %v199 = vadd.f32 %v198, %v168
  %v200 = vadd.f32 %v199, %v174
  %v201 = vadd.f32 %v200, %v180
  %v202 = vrot.slane %v201, 4
  %v203 = vadd.f32 %v201, %v202
  %v204 = vrot.slane %v203, 2
  %v205 = vadd.f32 %v203, %v204
  %v206 = vrot.slane %v205, 1
  %v207 = vadd.f32 %v205, %v206
  %v208 = vmul.f32 %v136, %v136
  %v209 = vmul.f32 %v138, %v138
  %v210 = vmul.f32 %v142, %v142
  %v211 = vmul.f32 %v144, %v144
  %v212 = vmul.f32 %v148, %v148
  %v213 = vmul.f32 %v150, %v150
  %v214 = vmul.f32 %v154, %v154
  %v215 = vmul.f32 %v156, %v156
  %v216 = vmul.f32 %v160, %v160
  %v217 = vmul.f32 %v162, %v162
  %v218 = vmul.f32 %v166, %v166
  %v219 = vmul.f32 %v168, %v168
  %v220 = vmul.f32 %v172, %v172
  %v221 = vmul.f32 %v174, %v174
  %v222 = vmul.f32 %v178, %v178
  %v223 = vmul.f32 %v180, %v180
  %v224 = vadd.f32 %v208, %v210
  %v225 = vadd.f32 %v224, %v212
  %v226 = vadd.f32 %v225, %v214
  %v227 = vadd.f32 %v226, %v216
  %v228 = vadd.f32 %v227, %v218
  %v229 = vadd.f32 %v228, %v220
  %v230 = vadd.f32 %v229, %v222
  %v231 = vrot.slane %v230, 4
  %v232 = vadd.f32 %v230, %v231
  %v233 = vrot.slane %v232, 2
  %v234 = vadd.f32 %v232, %v233
  %v235 = vrot.slane %v234, 1
  %v236 = vadd.f32 %v234, %v235
  %v237 = vadd.f32 %v209, %v211
  %v238 = vadd.f32 %v237, %v213
  %v239 = vadd.f32 %v238, %v215
  %v240 = vadd.f32 %v239, %v217
  %v241 = vadd.f32 %v240, %v219
  %v242 = vadd.f32 %v241, %v221
  %v243 = vadd.f32 %v242, %v223
  %v244 = vrot.slane %v243, 4
  %v245 = vadd.f32 %v243, %v244
  %v246 = vrot.slane %v245, 2
  %v247 = vadd.f32 %v245, %v246
  %v248 = vrot.slane %v247, 1
  %v249 = vadd.f32 %v247, %v248
  %251 = vrot.lane.b32.xlu0 %v194, 64
  %v252 = vpop.permute.xlu0 %251
  %v254 = vadd.f32 %v194, %v252
  %256 = vrot.lane.b32.xlu0 %v236, 64
  %v257 = vpop.permute.xlu0 %256
  %v259 = vadd.f32 %v236, %v257
  %v260 = vadd.f32 %v254, %v207
  %v261 = vadd.f32 %v259, %v249
  %263 = vrot.lane.b32.xlu0 %v207, 64
  %v264 = vpop.permute.xlu0 %263
  %v266 = vadd.f32 %v260, %v264
  %268 = vrot.lane.b32.xlu0 %v249, 64
  %v269 = vpop.permute.xlu0 %268
  %v271 = vadd.f32 %v261, %v269
  %v272 = vmul.f32 %v266, 0.00390625
  %v273 = vmul.f32 %v271, 0.00390625
  %v274 = vmul.f32 %v272, %v272
  %v275 = vsub.f32 %v273, %v274
  %v276 = vld [vmem:[%s5] sm:$0xff]
  %v277 = vld [vmem:[%s5 + $0x8] sm:$0xff]
  %v278 = vadd.f32 %v275, 1e-05
  %v279 = vrsqrt.pop %v278
  %v280 = vmul.f32 %v276, %v279
  %v281 = vmul.f32 %v272, %v280
  %v283 = vrot.slane %v281, 7
  %v285 = vsub.f32 %v276, %v283
  %287 = vrot.lane.b32.xlu0 %v280, 64
  %v288 = vpop.permute.xlu0 %287
  %vm290 = vcmask 523264
  %v291 = vsel %vm290, %v280, %v288
  %293 = vrot.lane.b32.xlu0 %v285, 64
  %v294 = vpop.permute.xlu0 %293
  %v296 = vsel %vm290, %v285, %v294
  %v297 = vlaneseq
  %v298 = vshrl.u32 %v297, 7
  %v299 = vsub.s32 0, %v298
  %v300 = vrot.slane %v291, %v299
  %v301 = vmul.f32 %v136, %v300
  %v302 = vmul.f32 %v138, %v300
  %v303 = vmul.f32 %v142, %v300
  %v304 = vmul.f32 %v144, %v300
  %v305 = vmul.f32 %v148, %v300
  %v306 = vmul.f32 %v150, %v300
  %v307 = vmul.f32 %v154, %v300
  %v308 = vmul.f32 %v156, %v300
  %v309 = vmul.f32 %v160, %v300
  %v310 = vmul.f32 %v162, %v300
  %v311 = vmul.f32 %v166, %v300
  %v312 = vmul.f32 %v168, %v300
  %v313 = vmul.f32 %v172, %v300
  %v314 = vmul.f32 %v174, %v300
  %v315 = vmul.f32 %v178, %v300
  %v316 = vmul.f32 %v180, %v300
  %v317 = vlaneseq
  %v318 = vshrl.u32 %v317, 7
  %v319 = vsub.s32 1, %v318
  %v320 = vrot.slane %v296, %v319
  %v321 = vadd.f32 %v301, %v320
  %v322 = vadd.f32 %v302, %v320
  %v323 = vadd.f32 %v303, %v320
  %v324 = vadd.f32 %v304, %v320
  %v325 = vadd.f32 %v305, %v320
  %v326 = vadd.f32 %v306, %v320
  %v327 = vadd.f32 %v307, %v320
  %v328 = vadd.f32 %v308, %v320
  %v329 = vadd.f32 %v309, %v320
  %v330 = vadd.f32 %v310, %v320
  %v331 = vadd.f32 %v311, %v320
  %v332 = vadd.f32 %v312, %v320
  %v333 = vadd.f32 %v313, %v320
  %v334 = vadd.f32 %v314, %v320
  %v335 = vadd.f32 %v315, %v320
  %v336 = vadd.f32 %v316, %v320
  %v337 = vmax.f32 %v321, %v322
  %v338 = vmax.f32 %v323, %v324
  %v339 = vmax.f32 %v325, %v326
  %v340 = vmax.f32 %v327, %v328
  %v341 = vmax.f32 %v329, %v330
  %v342 = vmax.f32 %v331, %v332
  %v343 = vmax.f32 %v333, %v334
  %v344 = vmax.f32 %v335, %v336
  %v345 = vmax.f32 %v337, 0.0
  %v346 = vmax.f32 %v338, 0.0
  %v347 = vmax.f32 %v339, 0.0
  %v348 = vmax.f32 %v340, 0.0
  %v349 = vmax.f32 %v341, 0.0
  %v350 = vmax.f32 %v342, 0.0
  %v351 = vmax.f32 %v343, 0.0
  %v352 = vmax.f32 %v344, 0.0
  %v353 = vld [vmem:[%s2] sm:$0xff]
  %v354 = vld [vmem:[%s2 + $0x8] sm:$0xff]
  %v355 = vld [vmem:[%s2 + $0x10] sm:$0xff]
  %v356 = vld [vmem:[%s2 + $0x18] sm:$0xff]
  %v357 = vld [vmem:[%s2 + $0x20] sm:$0xff]
  %v358 = vld [vmem:[%s2 + $0x28] sm:$0xff]
  %v359 = vld [vmem:[%s2 + $0x30] sm:$0xff]
  %v360 = vld [vmem:[%s2 + $0x38] sm:$0xff]
  %v361 = vld [vmem:[%s2 + $0x40] sm:$0xff]
  %v362 = vld [vmem:[%s2 + $0x48] sm:$0xff]
  %v363 = vld [vmem:[%s2 + $0x50] sm:$0xff]
  %v364 = vld [vmem:[%s2 + $0x58] sm:$0xff]
  %v365 = vld [vmem:[%s2 + $0x60] sm:$0xff]
  %v366 = vld [vmem:[%s2 + $0x68] sm:$0xff]
  %v367 = vld [vmem:[%s2 + $0x70] sm:$0xff]
  %v368 = vld [vmem:[%s2 + $0x78] sm:$0xff]
  %v369 = vld [vmem:[%s2 + $0x80] sm:$0xff]
  %v370 = vld [vmem:[%s2 + $0x88] sm:$0xff]
  %v371 = vld [vmem:[%s2 + $0x90] sm:$0xff]
  %v372 = vld [vmem:[%s2 + $0x98] sm:$0xff]
  %v373 = vld [vmem:[%s2 + $0xa0] sm:$0xff]
  %v374 = vld [vmem:[%s2 + $0xa8] sm:$0xff]
  %v375 = vld [vmem:[%s2 + $0xb0] sm:$0xff]
  %v376 = vld [vmem:[%s2 + $0xb8] sm:$0xff]
  %v377 = vld [vmem:[%s2 + $0xc0] sm:$0xff]
  %v378 = vld [vmem:[%s2 + $0xc8] sm:$0xff]
  %v379 = vld [vmem:[%s2 + $0xd0] sm:$0xff]
  %v380 = vld [vmem:[%s2 + $0xd8] sm:$0xff]
  %v381 = vld [vmem:[%s2 + $0xe0] sm:$0xff]
  %v382 = vld [vmem:[%s2 + $0xe8] sm:$0xff]
  %v383 = vld [vmem:[%s2 + $0xf0] sm:$0xff]
  %v384 = vld [vmem:[%s2 + $0xf8] sm:$0xff]
  %v385 = vld [vmem:[%s2 + $0x100] sm:$0xff]
  %v386 = vld [vmem:[%s2 + $0x108] sm:$0xff]
  %v387 = vld [vmem:[%s2 + $0x110] sm:$0xff]
  %v388 = vld [vmem:[%s2 + $0x118] sm:$0xff]
  %v389 = vld [vmem:[%s2 + $0x120] sm:$0xff]
  %v390 = vld [vmem:[%s2 + $0x128] sm:$0xff]
  %v391 = vld [vmem:[%s2 + $0x130] sm:$0xff]
  %v392 = vld [vmem:[%s2 + $0x138] sm:$0xff]
  %v393 = vld [vmem:[%s2 + $0x140] sm:$0xff]
  %v394 = vld [vmem:[%s2 + $0x148] sm:$0xff]
  %v395 = vld [vmem:[%s2 + $0x150] sm:$0xff]
  %v396 = vld [vmem:[%s2 + $0x158] sm:$0xff]
  %v397 = vld [vmem:[%s2 + $0x160] sm:$0xff]
  %v398 = vld [vmem:[%s2 + $0x168] sm:$0xff]
  %v399 = vld [vmem:[%s2 + $0x170] sm:$0xff]
  %v400 = vld [vmem:[%s2 + $0x178] sm:$0xff]
  %v401 = vld [vmem:[%s2 + $0x180] sm:$0xff]
  %v402 = vld [vmem:[%s2 + $0x188] sm:$0xff]
  %v403 = vld [vmem:[%s2 + $0x190] sm:$0xff]
  %v404 = vld [vmem:[%s2 + $0x198] sm:$0xff]
  %v405 = vld [vmem:[%s2 + $0x1a0] sm:$0xff]
  %v406 = vld [vmem:[%s2 + $0x1a8] sm:$0xff]
  %v407 = vld [vmem:[%s2 + $0x1b0] sm:$0xff]
  %v408 = vld [vmem:[%s2 + $0x1b8] sm:$0xff]
  %v409 = vld [vmem:[%s2 + $0x1c0] sm:$0xff]
  %v410 = vld [vmem:[%s2 + $0x1c8] sm:$0xff]
  %v411 = vld [vmem:[%s2 + $0x1d0] sm:$0xff]
  %v412 = vld [vmem:[%s2 + $0x1d8] sm:$0xff]
  %v413 = vld [vmem:[%s2 + $0x1e0] sm:$0xff]
  %v414 = vld [vmem:[%s2 + $0x1e8] sm:$0xff]
  %v415 = vld [vmem:[%s2 + $0x1f0] sm:$0xff]
  %v416 = vld [vmem:[%s2 + $0x1f8] sm:$0xff]
  %417 = vmatprep.subr.mxu0 %v386
  %418 = vmatpush1.msra.mxu0 %v385
  %419 = vmatprep.subr.mxu0 %v388
  %420 = vmatpush1.msra.mxu0 %v387
  %421 = vmatprep.subr.mxu0 %v390
  %422 = vmatpush1.msra.mxu0 %v389
  %423 = vmatprep.subr.mxu0 %v392
  %424 = vmatpush1.msra.mxu0 %v391
  %425 = vmatprep.subr.mxu0 %v394
  %426 = vmatpush1.msra.mxu0 %v393
  %427 = vmatprep.subr.mxu0 %v396
  %428 = vmatpush1.msra.mxu0 %v395
  %429 = vmatprep.subr.mxu0 %v398
  %430 = vmatpush1.msra.mxu0 %v397
  %431 = vmatprep.subr.mxu0 %v400
  %432 = vmatpush1.msra.mxu0 %v399
  %433 = vmatprep.subr.mxu0 %v402
  %434 = vmatpush1.msra.mxu0 %v401
  %435 = vmatprep.subr.mxu0 %v404
  %436 = vmatpush1.msra.mxu0 %v403
  %437 = vmatprep.subr.mxu0 %v406
  %438 = vmatpush1.msra.mxu0 %v405
  %439 = vmatprep.subr.mxu0 %v408
  %440 = vmatpush1.msra.mxu0 %v407
  %441 = vmatprep.subr.mxu0 %v410
  %442 = vmatpush1.msra.mxu0 %v409
  %443 = vmatprep.subr.mxu0 %v412
  %444 = vmatpush1.msra.mxu0 %v411
  %445 = vmatprep.subr.mxu0 %v414
  %446 = vmatpush1.msra.mxu0 %v413
  %447 = vmatprep.subr.mxu0 %v416
  %448 = vmatpush1.msra.mxu0 %v415
  %449 = vmatprep.subr.mxu0 0.0
  %450 = vmatpush1.msra.mxu0 0.0
  %451 = vmatprep.subr.mxu0 0.0
  %452 = vmatpush1.msra.mxu0 0.0
  %453 = vmatprep.subr.mxu0 0.0
  %454 = vmatpush1.msra.mxu0 0.0
  %455 = vmatprep.subr.mxu0 0.0
  %456 = vmatpush1.msra.mxu0 0.0
  %457 = vmatprep.subr.mxu0 0.0
  %458 = vmatpush1.msra.mxu0 0.0
  %459 = vmatprep.subr.mxu0 0.0
  %460 = vmatpush1.msra.mxu0 0.0
  %461 = vmatprep.subr.mxu0 0.0
  %462 = vmatpush1.msra.mxu0 0.0
  %463 = vmatprep.subr.mxu0 0.0
  %464 = vmatpush1.msra.mxu0 0.0
  %465 = vmatprep.subr.mxu0 0.0
  %466 = vmatpush1.msra.mxu0 0.0
  %467 = vmatprep.subr.mxu0 0.0
  %468 = vmatpush1.msra.mxu0 0.0
  %469 = vmatprep.subr.mxu0 0.0
  %470 = vmatpush1.msra.mxu0 0.0
  %471 = vmatprep.subr.mxu0 0.0
  %472 = vmatpush1.msra.mxu0 0.0
  %473 = vmatprep.subr.mxu0 0.0
  %474 = vmatpush1.msra.mxu0 0.0
  %475 = vmatprep.subr.mxu0 0.0
  %476 = vmatpush1.msra.mxu0 0.0
  %477 = vmatprep.subr.mxu0 0.0
  %478 = vmatpush1.msra.mxu0 0.0
  %479 = vmatprep.subr.mxu0 0.0
  %480 = vmatpush1.msra.mxu0 0.0
  %481 = vmatprep.mubr.f32.mxu0 0.0
  %482 = vmatmul.mubr.f32.gmra.mrb[0].mxu0 %v346
  %v483 = vpop.f32.mrb[0].mxu0
  %v484 = vadd.f32 0.0, %v483
  %v485 = vpop.f32.mrb[0].mxu0
  %v486 = vadd.f32 0.0, %v485
  %487 = vdwg.mxu0
  %488 = vmatprep.subr.mxu0 %v354
  %489 = vmatpush1.msra.mxu0 %v353
  %490 = vmatprep.subr.mxu0 %v356
  %491 = vmatpush1.msra.mxu0 %v355
  %492 = vmatprep.subr.mxu0 %v358
  %493 = vmatpush1.msra.mxu0 %v357
  %494 = vmatprep.subr.mxu0 %v360
  %495 = vmatpush1.msra.mxu0 %v359
  %496 = vmatprep.subr.mxu0 %v362
  %497 = vmatpush1.msra.mxu0 %v361
  %498 = vmatprep.subr.mxu0 %v364
  %499 = vmatpush1.msra.mxu0 %v363
  %500 = vmatprep.subr.mxu0 %v366
  %501 = vmatpush1.msra.mxu0 %v365
  %502 = vmatprep.subr.mxu0 %v368
  %503 = vmatpush1.msra.mxu0 %v367
  %504 = vmatprep.subr.mxu0 %v370
  %505 = vmatpush1.msra.mxu0 %v369
  %506 = vmatprep.subr.mxu0 %v372
  %507 = vmatpush1.msra.mxu0 %v371
  %508 = vmatprep.subr.mxu0 %v374
  %509 = vmatpush1.msra.mxu0 %v373
  %510 = vmatprep.subr.mxu0 %v376
  %511 = vmatpush1.msra.mxu0 %v375
  %512 = vmatprep.subr.mxu0 %v378
  %513 = vmatpush1.msra.mxu0 %v377
  %514 = vmatprep.subr.mxu0 %v380
  %515 = vmatpush1.msra.mxu0 %v379
  %516 = vmatprep.subr.mxu0 %v382
  %517 = vmatpush1.msra.mxu0 %v381
  %518 = vmatprep.subr.mxu0 %v384
  %519 = vmatpush1.msra.mxu0 %v383
  %520 = vmatprep.subr.mxu0 0.0
  %521 = vmatpush1.msra.mxu0 0.0
  %522 = vmatprep.subr.mxu0 0.0
  %523 = vmatpush1.msra.mxu0 0.0
  %524 = vmatprep.subr.mxu0 0.0
  %525 = vmatpush1.msra.mxu0 0.0
  %526 = vmatprep.subr.mxu0 0.0
  %527 = vmatpush1.msra.mxu0 0.0
  %528 = vmatprep.subr.mxu0 0.0
  %529 = vmatpush1.msra.mxu0 0.0
  %530 = vmatprep.subr.mxu0 0.0
  %531 = vmatpush1.msra.mxu0 0.0
  %532 = vmatprep.subr.mxu0 0.0
  %533 = vmatpush1.msra.mxu0 0.0
  %534 = vmatprep.subr.mxu0 0.0
  %535 = vmatpush1.msra.mxu0 0.0
  %536 = vmatprep.subr.mxu0 0.0
  %537 = vmatpush1.msra.mxu0 0.0
  %538 = vmatprep.subr.mxu0 0.0
  %539 = vmatpush1.msra.mxu0 0.0
  %540 = vmatprep.subr.mxu0 0.0
  %541 = vmatpush1.msra.mxu0 0.0
  %542 = vmatprep.subr.mxu0 0.0
  %543 = vmatpush1.msra.mxu0 0.0
  %544 = vmatprep.subr.mxu0 0.0
  %545 = vmatpush1.msra.mxu0 0.0
  %546 = vmatprep.subr.mxu0 0.0
  %547 = vmatpush1.msra.mxu0 0.0
  %548 = vmatprep.subr.mxu0 0.0
  %549 = vmatpush1.msra.mxu0 0.0
  %550 = vmatprep.subr.mxu0 0.0
  %551 = vmatpush1.msra.mxu0 0.0
  %552 = vmatprep.mubr.f32.mxu0 0.0
  %553 = vmatmul.mubr.f32.gmra.mrb[0].mxu0 %v345
  %v554 = vpop.f32.mrb[0].mxu0
  %v555 = vadd.f32 %v484, %v554
  %v556 = vpop.f32.mrb[0].mxu0
  %v557 = vadd.f32 %v486, %v556
  %558 = vdwg.mxu0
  %v559 = vld [vmem:[%s2 + $0x200] sm:$0xff]
  %v560 = vld [vmem:[%s2 + $0x208] sm:$0xff]
  %v561 = vld [vmem:[%s2 + $0x210] sm:$0xff]
  %v562 = vld [vmem:[%s2 + $0x218] sm:$0xff]
  %v563 = vld [vmem:[%s2 + $0x220] sm:$0xff]
  %v564 = vld [vmem:[%s2 + $0x228] sm:$0xff]
  %v565 = vld [vmem:[%s2 + $0x230] sm:$0xff]
  %v566 = vld [vmem:[%s2 + $0x238] sm:$0xff]
  %v567 = vld [vmem:[%s2 + $0x240] sm:$0xff]
  %v568 = vld [vmem:[%s2 + $0x248] sm:$0xff]
  %v569 = vld [vmem:[%s2 + $0x250] sm:$0xff]
  %v570 = vld [vmem:[%s2 + $0x258] sm:$0xff]
  %v571 = vld [vmem:[%s2 + $0x260] sm:$0xff]
  %v572 = vld [vmem:[%s2 + $0x268] sm:$0xff]
  %v573 = vld [vmem:[%s2 + $0x270] sm:$0xff]
  %v574 = vld [vmem:[%s2 + $0x278] sm:$0xff]
  %v575 = vld [vmem:[%s2 + $0x280] sm:$0xff]
  %v576 = vld [vmem:[%s2 + $0x288] sm:$0xff]
  %v577 = vld [vmem:[%s2 + $0x290] sm:$0xff]
  %v578 = vld [vmem:[%s2 + $0x298] sm:$0xff]
  %v579 = vld [vmem:[%s2 + $0x2a0] sm:$0xff]
  %v580 = vld [vmem:[%s2 + $0x2a8] sm:$0xff]
  %v581 = vld [vmem:[%s2 + $0x2b0] sm:$0xff]
  %v582 = vld [vmem:[%s2 + $0x2b8] sm:$0xff]
  %v583 = vld [vmem:[%s2 + $0x2c0] sm:$0xff]
  %v584 = vld [vmem:[%s2 + $0x2c8] sm:$0xff]
  %v585 = vld [vmem:[%s2 + $0x2d0] sm:$0xff]
  %v586 = vld [vmem:[%s2 + $0x2d8] sm:$0xff]
  %v587 = vld [vmem:[%s2 + $0x2e0] sm:$0xff]
  %v588 = vld [vmem:[%s2 + $0x2e8] sm:$0xff]
  %v589 = vld [vmem:[%s2 + $0x2f0] sm:$0xff]
  %v590 = vld [vmem:[%s2 + $0x2f8] sm:$0xff]
  %591 = vmatprep.subr.mxu0 %v560
  %592 = vmatpush1.msra.mxu0 %v559
  %593 = vmatprep.subr.mxu0 %v562
  %594 = vmatpush1.msra.mxu0 %v561
  %595 = vmatprep.subr.mxu0 %v564
  %596 = vmatpush1.msra.mxu0 %v563
  %597 = vmatprep.subr.mxu0 %v566
  %598 = vmatpush1.msra.mxu0 %v565
  %599 = vmatprep.subr.mxu0 %v568
  %600 = vmatpush1.msra.mxu0 %v567
  %601 = vmatprep.subr.mxu0 %v570
  %602 = vmatpush1.msra.mxu0 %v569
  %603 = vmatprep.subr.mxu0 %v572
  %604 = vmatpush1.msra.mxu0 %v571
  %605 = vmatprep.subr.mxu0 %v574
  %606 = vmatpush1.msra.mxu0 %v573
  %607 = vmatprep.subr.mxu0 %v576
  %608 = vmatpush1.msra.mxu0 %v575
  %609 = vmatprep.subr.mxu0 %v578
  %610 = vmatpush1.msra.mxu0 %v577
  %611 = vmatprep.subr.mxu0 %v580
  %612 = vmatpush1.msra.mxu0 %v579
  %613 = vmatprep.subr.mxu0 %v582
  %614 = vmatpush1.msra.mxu0 %v581
  %615 = vmatprep.subr.mxu0 %v584
  %616 = vmatpush1.msra.mxu0 %v583
  %617 = vmatprep.subr.mxu0 %v586
  %618 = vmatpush1.msra.mxu0 %v585
  %619 = vmatprep.subr.mxu0 %v588
  %620 = vmatpush1.msra.mxu0 %v587
  %621 = vmatprep.subr.mxu0 %v590
  %622 = vmatpush1.msra.mxu0 %v589
  %623 = vmatprep.subr.mxu0 0.0
  %624 = vmatpush1.msra.mxu0 0.0
  %625 = vmatprep.subr.mxu0 0.0
  %626 = vmatpush1.msra.mxu0 0.0
  %627 = vmatprep.subr.mxu0 0.0
  %628 = vmatpush1.msra.mxu0 0.0
  %629 = vmatprep.subr.mxu0 0.0
  %630 = vmatpush1.msra.mxu0 0.0
  %631 = vmatprep.subr.mxu0 0.0
  %632 = vmatpush1.msra.mxu0 0.0
  %633 = vmatprep.subr.mxu0 0.0
  %634 = vmatpush1.msra.mxu0 0.0
  %635 = vmatprep.subr.mxu0 0.0
  %636 = vmatpush1.msra.mxu0 0.0
  %637 = vmatprep.subr.mxu0 0.0
  %638 = vmatpush1.msra.mxu0 0.0
  %639 = vmatprep.subr.mxu0 0.0
  %640 = vmatpush1.msra.mxu0 0.0
  %641 = vmatprep.subr.mxu0 0.0
  %642 = vmatpush1.msra.mxu0 0.0
  %643 = vmatprep.subr.mxu0 0.0
  %644 = vmatpush1.msra.mxu0 0.0
  %645 = vmatprep.subr.mxu0 0.0
  %646 = vmatpush1.msra.mxu0 0.0
  %647 = vmatprep.subr.mxu0 0.0
  %648 = vmatpush1.msra.mxu0 0.0
  %649 = vmatprep.subr.mxu0 0.0
  %650 = vmatpush1.msra.mxu0 0.0
  %651 = vmatprep.subr.mxu0 0.0
  %652 = vmatpush1.msra.mxu0 0.0
  %653 = vmatprep.subr.mxu0 0.0
  %654 = vmatpush1.msra.mxu0 0.0
  %655 = vmatprep.mubr.f32.mxu0 0.0
  %656 = vmatmul.mubr.f32.gmra.mrb[0].mxu0 %v347
  %v657 = vpop.f32.mrb[0].mxu0
  %v658 = vadd.f32 0.0, %v657
  %v659 = vpop.f32.mrb[0].mxu0
  %v660 = vadd.f32 0.0, %v659
  %661 = vdwg.mxu0
  %v662 = vadd.f32 %v555, %v658
  %v663 = vadd.f32 %v557, %v660
  %v664 = vld [vmem:[%s2 + $0x300] sm:$0xff]
  %v665 = vld [vmem:[%s2 + $0x308] sm:$0xff]
  %v666 = vld [vmem:[%s2 + $0x310] sm:$0xff]
  %v667 = vld [vmem:[%s2 + $0x318] sm:$0xff]
  %v668 = vld [vmem:[%s2 + $0x320] sm:$0xff]
  %v669 = vld [vmem:[%s2 + $0x328] sm:$0xff]
  %v670 = vld [vmem:[%s2 + $0x330] sm:$0xff]
  %v671 = vld [vmem:[%s2 + $0x338] sm:$0xff]
  %v672 = vld [vmem:[%s2 + $0x340] sm:$0xff]
  %v673 = vld [vmem:[%s2 + $0x348] sm:$0xff]
  %v674 = vld [vmem:[%s2 + $0x350] sm:$0xff]
  %v675 = vld [vmem:[%s2 + $0x358] sm:$0xff]
  %v676 = vld [vmem:[%s2 + $0x360] sm:$0xff]
  %v677 = vld [vmem:[%s2 + $0x368] sm:$0xff]
  %v678 = vld [vmem:[%s2 + $0x370] sm:$0xff]
  %v679 = vld [vmem:[%s2 + $0x378] sm:$0xff]
  %v680 = vld [vmem:[%s2 + $0x380] sm:$0xff]
  %v681 = vld [vmem:[%s2 + $0x388] sm:$0xff]
  %v682 = vld [vmem:[%s2 + $0x390] sm:$0xff]
  %v683 = vld [vmem:[%s2 + $0x398] sm:$0xff]
  %v684 = vld [vmem:[%s2 + $0x3a0] sm:$0xff]
  %v685 = vld [vmem:[%s2 + $0x3a8] sm:$0xff]
  %v686 = vld [vmem:[%s2 + $0x3b0] sm:$0xff]
  %v687 = vld [vmem:[%s2 + $0x3b8] sm:$0xff]
  %v688 = vld [vmem:[%s2 + $0x3c0] sm:$0xff]
  %v689 = vld [vmem:[%s2 + $0x3c8] sm:$0xff]
  %v690 = vld [vmem:[%s2 + $0x3d0] sm:$0xff]
  %v691 = vld [vmem:[%s2 + $0x3d8] sm:$0xff]
  %v692 = vld [vmem:[%s2 + $0x3e0] sm:$0xff]
  %v693 = vld [vmem:[%s2 + $0x3e8] sm:$0xff]
  %v694 = vld [vmem:[%s2 + $0x3f0] sm:$0xff]
  %v695 = vld [vmem:[%s2 + $0x3f8] sm:$0xff]
  %696 = vmatprep.subr.mxu0 %v665
  %697 = vmatpush1.msra.mxu0 %v664
  %698 = vmatprep.subr.mxu0 %v667
  %699 = vmatpush1.msra.mxu0 %v666
  %700 = vmatprep.subr.mxu0 %v669
  %701 = vmatpush1.msra.mxu0 %v668
  %702 = vmatprep.subr.mxu0 %v671
  %703 = vmatpush1.msra.mxu0 %v670
  %704 = vmatprep.subr.mxu0 %v673
  %705 = vmatpush1.msra.mxu0 %v672
  %706 = vmatprep.subr.mxu0 %v675
  %707 = vmatpush1.msra.mxu0 %v674
  %708 = vmatprep.subr.mxu0 %v677
  %709 = vmatpush1.msra.mxu0 %v676
  %710 = vmatprep.subr.mxu0 %v679
  %711 = vmatpush1.msra.mxu0 %v678
  %712 = vmatprep.subr.mxu0 %v681
  %713 = vmatpush1.msra.mxu0 %v680
  %714 = vmatprep.subr.mxu0 %v683
  %715 = vmatpush1.msra.mxu0 %v682
  %716 = vmatprep.subr.mxu0 %v685
  %717 = vmatpush1.msra.mxu0 %v684
  %718 = vmatprep.subr.mxu0 %v687
  %719 = vmatpush1.msra.mxu0 %v686
  %720 = vmatprep.subr.mxu0 %v689
  %721 = vmatpush1.msra.mxu0 %v688
  %722 = vmatprep.subr.mxu0 %v691
  %723 = vmatpush1.msra.mxu0 %v690
  %724 = vmatprep.subr.mxu0 %v693
  %725 = vmatpush1.msra.mxu0 %v692
  %726 = vmatprep.subr.mxu0 %v695
  %727 = vmatpush1.msra.mxu0 %v694
  %728 = vmatprep.subr.mxu0 0.0
  %729 = vmatpush1.msra.mxu0 0.0
  %730 = vmatprep.subr.mxu0 0.0
  %731 = vmatpush1.msra.mxu0 0.0
  %732 = vmatprep.subr.mxu0 0.0
  %733 = vmatpush1.msra.mxu0 0.0
  %734 = vmatprep.subr.mxu0 0.0
  %735 = vmatpush1.msra.mxu0 0.0
  %736 = vmatprep.subr.mxu0 0.0
  %737 = vmatpush1.msra.mxu0 0.0
  %738 = vmatprep.subr.mxu0 0.0
  %739 = vmatpush1.msra.mxu0 0.0
  %740 = vmatprep.subr.mxu0 0.0
  %741 = vmatpush1.msra.mxu0 0.0
  %742 = vmatprep.subr.mxu0 0.0
  %743 = vmatpush1.msra.mxu0 0.0
  %744 = vmatprep.subr.mxu0 0.0
  %745 = vmatpush1.msra.mxu0 0.0
  %746 = vmatprep.subr.mxu0 0.0
  %747 = vmatpush1.msra.mxu0 0.0
  %748 = vmatprep.subr.mxu0 0.0
  %749 = vmatpush1.msra.mxu0 0.0
  %750 = vmatprep.subr.mxu0 0.0
  %751 = vmatpush1.msra.mxu0 0.0
  %752 = vmatprep.subr.mxu0 0.0
  %753 = vmatpush1.msra.mxu0 0.0
  %754 = vmatprep.subr.mxu0 0.0
  %755 = vmatpush1.msra.mxu0 0.0
  %756 = vmatprep.subr.mxu0 0.0
  %757 = vmatpush1.msra.mxu0 0.0
  %758 = vmatprep.subr.mxu0 0.0
  %759 = vmatpush1.msra.mxu0 0.0
  %760 = vmatprep.mubr.f32.mxu0 0.0
  %761 = vmatmul.mubr.f32.gmra.mrb[0].mxu0 %v348
  %v762 = vpop.f32.mrb[0].mxu0
  %v763 = vadd.f32 0.0, %v762
  %v764 = vpop.f32.mrb[0].mxu0
  %v765 = vadd.f32 0.0, %v764
  %766 = vdwg.mxu0
  %v767 = vadd.f32 %v662, %v763
  %v768 = vadd.f32 %v663, %v765
  %v769 = vld [vmem:[%s2 + $0x400] sm:$0xff]
  %v770 = vld [vmem:[%s2 + $0x408] sm:$0xff]
  %v771 = vld [vmem:[%s2 + $0x410] sm:$0xff]
  %v772 = vld [vmem:[%s2 + $0x418] sm:$0xff]
  %v773 = vld [vmem:[%s2 + $0x420] sm:$0xff]
  %v774 = vld [vmem:[%s2 + $0x428] sm:$0xff]
  %v775 = vld [vmem:[%s2 + $0x430] sm:$0xff]
  %v776 = vld [vmem:[%s2 + $0x438] sm:$0xff]
  %v777 = vld [vmem:[%s2 + $0x440] sm:$0xff]
  %v778 = vld [vmem:[%s2 + $0x448] sm:$0xff]
  %v779 = vld [vmem:[%s2 + $0x450] sm:$0xff]
  %v780 = vld [vmem:[%s2 + $0x458] sm:$0xff]
  %v781 = vld [vmem:[%s2 + $0x460] sm:$0xff]
  %v782 = vld [vmem:[%s2 + $0x468] sm:$0xff]
  %v783 = vld [vmem:[%s2 + $0x470] sm:$0xff]
  %v784 = vld [vmem:[%s2 + $0x478] sm:$0xff]
  %v785 = vld [vmem:[%s2 + $0x480] sm:$0xff]
  %v786 = vld [vmem:[%s2 + $0x488] sm:$0xff]
  %v787 = vld [vmem:[%s2 + $0x490] sm:$0xff]
  %v788 = vld [vmem:[%s2 + $0x498] sm:$0xff]
  %v789 = vld [vmem:[%s2 + $0x4a0] sm:$0xff]
  %v790 = vld [vmem:[%s2 + $0x4a8] sm:$0xff]
  %v791 = vld [vmem:[%s2 + $0x4b0] sm:$0xff]
  %v792 = vld [vmem:[%s2 + $0x4b8] sm:$0xff]
  %v793 = vld [vmem:[%s2 + $0x4c0] sm:$0xff]
  %v794 = vld [vmem:[%s2 + $0x4c8] sm:$0xff]
  %v795 = vld [vmem:[%s2 + $0x4d0] sm:$0xff]
  %v796 = vld [vmem:[%s2 + $0x4d8] sm:$0xff]
  %v797 = vld [vmem:[%s2 + $0x4e0] sm:$0xff]
  %v798 = vld [vmem:[%s2 + $0x4e8] sm:$0xff]
  %v799 = vld [vmem:[%s2 + $0x4f0] sm:$0xff]
  %v800 = vld [vmem:[%s2 + $0x4f8] sm:$0xff]
  %801 = vmatprep.subr.mxu0 %v770
  %802 = vmatpush1.msra.mxu0 %v769
  %803 = vmatprep.subr.mxu0 %v772
  %804 = vmatpush1.msra.mxu0 %v771
  %805 = vmatprep.subr.mxu0 %v774
  %806 = vmatpush1.msra.mxu0 %v773
  %807 = vmatprep.subr.mxu0 %v776
  %808 = vmatpush1.msra.mxu0 %v775
  %809 = vmatprep.subr.mxu0 %v778
  %810 = vmatpush1.msra.mxu0 %v777
  %811 = vmatprep.subr.mxu0 %v780
  %812 = vmatpush1.msra.mxu0 %v779
  %813 = vmatprep.subr.mxu0 %v782
  %814 = vmatpush1.msra.mxu0 %v781
  %815 = vmatprep.subr.mxu0 %v784
  %816 = vmatpush1.msra.mxu0 %v783
  %817 = vmatprep.subr.mxu0 %v786
  %818 = vmatpush1.msra.mxu0 %v785
  %819 = vmatprep.subr.mxu0 %v788
  %820 = vmatpush1.msra.mxu0 %v787
  %821 = vmatprep.subr.mxu0 %v790
  %822 = vmatpush1.msra.mxu0 %v789
  %823 = vmatprep.subr.mxu0 %v792
  %824 = vmatpush1.msra.mxu0 %v791
  %825 = vmatprep.subr.mxu0 %v794
  %826 = vmatpush1.msra.mxu0 %v793
  %827 = vmatprep.subr.mxu0 %v796
  %828 = vmatpush1.msra.mxu0 %v795
  %829 = vmatprep.subr.mxu0 %v798
  %830 = vmatpush1.msra.mxu0 %v797
  %831 = vmatprep.subr.mxu0 %v800
  %832 = vmatpush1.msra.mxu0 %v799
  %833 = vmatprep.subr.mxu0 0.0
  %834 = vmatpush1.msra.mxu0 0.0
  %835 = vmatprep.subr.mxu0 0.0
  %836 = vmatpush1.msra.mxu0 0.0
  %837 = vmatprep.subr.mxu0 0.0
  %838 = vmatpush1.msra.mxu0 0.0
  %839 = vmatprep.subr.mxu0 0.0
  %840 = vmatpush1.msra.mxu0 0.0
  %841 = vmatprep.subr.mxu0 0.0
  %842 = vmatpush1.msra.mxu0 0.0
  %843 = vmatprep.subr.mxu0 0.0
  %844 = vmatpush1.msra.mxu0 0.0
  %845 = vmatprep.subr.mxu0 0.0
  %846 = vmatpush1.msra.mxu0 0.0
  %847 = vmatprep.subr.mxu0 0.0
  %848 = vmatpush1.msra.mxu0 0.0
  %849 = vmatprep.subr.mxu0 0.0
  %850 = vmatpush1.msra.mxu0 0.0
  %851 = vmatprep.subr.mxu0 0.0
  %852 = vmatpush1.msra.mxu0 0.0
  %853 = vmatprep.subr.mxu0 0.0
  %854 = vmatpush1.msra.mxu0 0.0
  %855 = vmatprep.subr.mxu0 0.0
  %856 = vmatpush1.msra.mxu0 0.0
  %857 = vmatprep.subr.mxu0 0.0
  %858 = vmatpush1.msra.mxu0 0.0
  %859 = vmatprep.subr.mxu0 0.0
  %860 = vmatpush1.msra.mxu0 0.0
  %861 = vmatprep.subr.mxu0 0.0
  %862 = vmatpush1.msra.mxu0 0.0
  %863 = vmatprep.subr.mxu0 0.0
  %864 = vmatpush1.msra.mxu0 0.0
  %865 = vmatprep.mubr.f32.mxu0 0.0
  %866 = vmatmul.mubr.f32.gmra.mrb[0].mxu0 %v349
  %v867 = vpop.f32.mrb[0].mxu0
  %v868 = vadd.f32 0.0, %v867
  %v869 = vpop.f32.mrb[0].mxu0
  %v870 = vadd.f32 0.0, %v869
  %871 = vdwg.mxu0
  %v872 = vadd.f32 %v767, %v868
  %v873 = vadd.f32 %v768, %v870
  %v874 = vld [vmem:[%s2 + $0x500] sm:$0xff]
  %v875 = vld [vmem:[%s2 + $0x508] sm:$0xff]
  %v876 = vld [vmem:[%s2 + $0x510] sm:$0xff]
  %v877 = vld [vmem:[%s2 + $0x518] sm:$0xff]
  %v878 = vld [vmem:[%s2 + $0x520] sm:$0xff]
  %v879 = vld [vmem:[%s2 + $0x528] sm:$0xff]
  %v880 = vld [vmem:[%s2 + $0x530] sm:$0xff]
  %v881 = vld [vmem:[%s2 + $0x538] sm:$0xff]
  %v882 = vld [vmem:[%s2 + $0x540] sm:$0xff]
  %v883 = vld [vmem:[%s2 + $0x548] sm:$0xff]
  %v884 = vld [vmem:[%s2 + $0x550] sm:$0xff]
  %v885 = vld [vmem:[%s2 + $0x558] sm:$0xff]
  %v886 = vld [vmem:[%s2 + $0x560] sm:$0xff]
  %v887 = vld [vmem:[%s2 + $0x568] sm:$0xff]
  %v888 = vld [vmem:[%s2 + $0x570] sm:$0xff]
  %v889 = vld [vmem:[%s2 + $0x578] sm:$0xff]
  %v890 = vld [vmem:[%s2 + $0x580] sm:$0xff]
  %v891 = vld [vmem:[%s2 + $0x588] sm:$0xff]
  %v892 = vld [vmem:[%s2 + $0x590] sm:$0xff]
  %v893 = vld [vmem:[%s2 + $0x598] sm:$0xff]
  %v894 = vld [vmem:[%s2 + $0x5a0] sm:$0xff]
  %v895 = vld [vmem:[%s2 + $0x5a8] sm:$0xff]
  %v896 = vld [vmem:[%s2 + $0x5b0] sm:$0xff]
  %v897 = vld [vmem:[%s2 + $0x5b8] sm:$0xff]
  %v898 = vld [vmem:[%s2 + $0x5c0] sm:$0xff]
  %v899 = vld [vmem:[%s2 + $0x5c8] sm:$0xff]
  %v900 = vld [vmem:[%s2 + $0x5d0] sm:$0xff]
  %v901 = vld [vmem:[%s2 + $0x5d8] sm:$0xff]
  %v902 = vld [vmem:[%s2 + $0x5e0] sm:$0xff]
  %v903 = vld [vmem:[%s2 + $0x5e8] sm:$0xff]
  %v904 = vld [vmem:[%s2 + $0x5f0] sm:$0xff]
  %v905 = vld [vmem:[%s2 + $0x5f8] sm:$0xff]
  %906 = vmatprep.subr.mxu0 %v875
  %907 = vmatpush1.msra.mxu0 %v874
  %908 = vmatprep.subr.mxu0 %v877
  %909 = vmatpush1.msra.mxu0 %v876
  %910 = vmatprep.subr.mxu0 %v879
  %911 = vmatpush1.msra.mxu0 %v878
  %912 = vmatprep.subr.mxu0 %v881
  %913 = vmatpush1.msra.mxu0 %v880
  %914 = vmatprep.subr.mxu0 %v883
  %915 = vmatpush1.msra.mxu0 %v882
  %916 = vmatprep.subr.mxu0 %v885
  %917 = vmatpush1.msra.mxu0 %v884
  %918 = vmatprep.subr.mxu0 %v887
  %919 = vmatpush1.msra.mxu0 %v886
  %920 = vmatprep.subr.mxu0 %v889
  %921 = vmatpush1.msra.mxu0 %v888
  %922 = vmatprep.subr.mxu0 %v891
  %923 = vmatpush1.msra.mxu0 %v890
  %924 = vmatprep.subr.mxu0 %v893
  %925 = vmatpush1.msra.mxu0 %v892
  %926 = vmatprep.subr.mxu0 %v895
  %927 = vmatpush1.msra.mxu0 %v894
  %928 = vmatprep.subr.mxu0 %v897
  %929 = vmatpush1.msra.mxu0 %v896
  %930 = vmatprep.subr.mxu0 %v899
  %931 = vmatpush1.msra.mxu0 %v898
  %932 = vmatprep.subr.mxu0 %v901
  %933 = vmatpush1.msra.mxu0 %v900
  %934 = vmatprep.subr.mxu0 %v903
  %935 = vmatpush1.msra.mxu0 %v902
  %936 = vmatprep.subr.mxu0 %v905
  %937 = vmatpush1.msra.mxu0 %v904
  %938 = vmatprep.subr.mxu0 0.0
  %939 = vmatpush1.msra.mxu0 0.0
  %940 = vmatprep.subr.mxu0 0.0
  %941 = vmatpush1.msra.mxu0 0.0
  %942 = vmatprep.subr.mxu0 0.0
  %943 = vmatpush1.msra.mxu0 0.0
  %944 = vmatprep.subr.mxu0 0.0
  %945 = vmatpush1.msra.mxu0 0.0
  %946 = vmatprep.subr.mxu0 0.0
  %947 = vmatpush1.msra.mxu0 0.0
  %948 = vmatprep.subr.mxu0 0.0
  %949 = vmatpush1.msra.mxu0 0.0
  %950 = vmatprep.subr.mxu0 0.0
  %951 = vmatpush1.msra.mxu0 0.0
  %952 = vmatprep.subr.mxu0 0.0
  %953 = vmatpush1.msra.mxu0 0.0
  %954 = vmatprep.subr.mxu0 0.0
  %955 = vmatpush1.msra.mxu0 0.0
  %956 = vmatprep.subr.mxu0 0.0
  %957 = vmatpush1.msra.mxu0 0.0
  %958 = vmatprep.subr.mxu0 0.0
  %959 = vmatpush1.msra.mxu0 0.0
  %960 = vmatprep.subr.mxu0 0.0
  %961 = vmatpush1.msra.mxu0 0.0
  %962 = vmatprep.subr.mxu0 0.0
  %963 = vmatpush1.msra.mxu0 0.0
  %964 = vmatprep.subr.mxu0 0.0
  %965 = vmatpush1.msra.mxu0 0.0
  %966 = vmatprep.subr.mxu0 0.0
  %967 = vmatpush1.msra.mxu0 0.0
  %968 = vmatprep.subr.mxu0 0.0
  %969 = vmatpush1.msra.mxu0 0.0
  %970 = vmatprep.mubr.f32.mxu0 0.0
  %971 = vmatmul.mubr.f32.gmra.mrb[0].mxu0 %v350
  %v972 = vpop.f32.mrb[0].mxu0
  %v973 = vadd.f32 0.0, %v972
  %v974 = vpop.f32.mrb[0].mxu0
  %v975 = vadd.f32 0.0, %v974
  %976 = vdwg.mxu0
  %v977 = vadd.f32 %v872, %v973
  %v978 = vadd.f32 %v873, %v975
  %v979 = vld [vmem:[%s2 + $0x600] sm:$0xff]
  %v980 = vld [vmem:[%s2 + $0x608] sm:$0xff]
  %v981 = vld [vmem:[%s2 + $0x610] sm:$0xff]
  %v982 = vld [vmem:[%s2 + $0x618] sm:$0xff]
  %v983 = vld [vmem:[%s2 + $0x620] sm:$0xff]
  %v984 = vld [vmem:[%s2 + $0x628] sm:$0xff]
  %v985 = vld [vmem:[%s2 + $0x630] sm:$0xff]
  %v986 = vld [vmem:[%s2 + $0x638] sm:$0xff]
  %v987 = vld [vmem:[%s2 + $0x640] sm:$0xff]
  %v988 = vld [vmem:[%s2 + $0x648] sm:$0xff]
  %v989 = vld [vmem:[%s2 + $0x650] sm:$0xff]
  %v990 = vld [vmem:[%s2 + $0x658] sm:$0xff]
  %v991 = vld [vmem:[%s2 + $0x660] sm:$0xff]
  %v992 = vld [vmem:[%s2 + $0x668] sm:$0xff]
  %v993 = vld [vmem:[%s2 + $0x670] sm:$0xff]
  %v994 = vld [vmem:[%s2 + $0x678] sm:$0xff]
  %v995 = vld [vmem:[%s2 + $0x680] sm:$0xff]
  %v996 = vld [vmem:[%s2 + $0x688] sm:$0xff]
  %v997 = vld [vmem:[%s2 + $0x690] sm:$0xff]
  %v998 = vld [vmem:[%s2 + $0x698] sm:$0xff]
  %v999 = vld [vmem:[%s2 + $0x6a0] sm:$0xff]
  %v1000 = vld [vmem:[%s2 + $0x6a8] sm:$0xff]
  %v1001 = vld [vmem:[%s2 + $0x6b0] sm:$0xff]
  %v1002 = vld [vmem:[%s2 + $0x6b8] sm:$0xff]
  %v1003 = vld [vmem:[%s2 + $0x6c0] sm:$0xff]
  %v1004 = vld [vmem:[%s2 + $0x6c8] sm:$0xff]
  %v1005 = vld [vmem:[%s2 + $0x6d0] sm:$0xff]
  %v1006 = vld [vmem:[%s2 + $0x6d8] sm:$0xff]
  %v1007 = vld [vmem:[%s2 + $0x6e0] sm:$0xff]
  %v1008 = vld [vmem:[%s2 + $0x6e8] sm:$0xff]
  %v1009 = vld [vmem:[%s2 + $0x6f0] sm:$0xff]
  %v1010 = vld [vmem:[%s2 + $0x6f8] sm:$0xff]
  %1011 = vmatprep.subr.mxu0 %v980
  %1012 = vmatpush1.msra.mxu0 %v979
  %1013 = vmatprep.subr.mxu0 %v982
  %1014 = vmatpush1.msra.mxu0 %v981
  %1015 = vmatprep.subr.mxu0 %v984
  %1016 = vmatpush1.msra.mxu0 %v983
  %1017 = vmatprep.subr.mxu0 %v986
  %1018 = vmatpush1.msra.mxu0 %v985
  %1019 = vmatprep.subr.mxu0 %v988
  %1020 = vmatpush1.msra.mxu0 %v987
  %1021 = vmatprep.subr.mxu0 %v990
  %1022 = vmatpush1.msra.mxu0 %v989
  %1023 = vmatprep.subr.mxu0 %v992
  %1024 = vmatpush1.msra.mxu0 %v991
  %1025 = vmatprep.subr.mxu0 %v994
  %1026 = vmatpush1.msra.mxu0 %v993
  %1027 = vmatprep.subr.mxu0 %v996
  %1028 = vmatpush1.msra.mxu0 %v995
  %1029 = vmatprep.subr.mxu0 %v998
  %1030 = vmatpush1.msra.mxu0 %v997
  %1031 = vmatprep.subr.mxu0 %v1000
  %1032 = vmatpush1.msra.mxu0 %v999
  %1033 = vmatprep.subr.mxu0 %v1002
  %1034 = vmatpush1.msra.mxu0 %v1001
  %1035 = vmatprep.subr.mxu0 %v1004
  %1036 = vmatpush1.msra.mxu0 %v1003
  %1037 = vmatprep.subr.mxu0 %v1006
  %1038 = vmatpush1.msra.mxu0 %v1005
  %1039 = vmatprep.subr.mxu0 %v1008
  %1040 = vmatpush1.msra.mxu0 %v1007
  %1041 = vmatprep.subr.mxu0 %v1010
  %1042 = vmatpush1.msra.mxu0 %v1009
  %1043 = vmatprep.subr.mxu0 0.0
  %1044 = vmatpush1.msra.mxu0 0.0
  %1045 = vmatprep.subr.mxu0 0.0
  %1046 = vmatpush1.msra.mxu0 0.0
  %1047 = vmatprep.subr.mxu0 0.0
  %1048 = vmatpush1.msra.mxu0 0.0
  %1049 = vmatprep.subr.mxu0 0.0
  %1050 = vmatpush1.msra.mxu0 0.0
  %1051 = vmatprep.subr.mxu0 0.0
  %1052 = vmatpush1.msra.mxu0 0.0
  %1053 = vmatprep.subr.mxu0 0.0
  %1054 = vmatpush1.msra.mxu0 0.0
  %1055 = vmatprep.subr.mxu0 0.0
  %1056 = vmatpush1.msra.mxu0 0.0
  %1057 = vmatprep.subr.mxu0 0.0
  %1058 = vmatpush1.msra.mxu0 0.0
  %1059 = vmatprep.subr.mxu0 0.0
  %1060 = vmatpush1.msra.mxu0 0.0
  %1061 = vmatprep.subr.mxu0 0.0
  %1062 = vmatpush1.msra.mxu0 0.0
  %1063 = vmatprep.subr.mxu0 0.0
  %1064 = vmatpush1.msra.mxu0 0.0
  %1065 = vmatprep.subr.mxu0 0.0
  %1066 = vmatpush1.msra.mxu0 0.0
  %1067 = vmatprep.subr.mxu0 0.0
  %1068 = vmatpush1.msra.mxu0 0.0
  %1069 = vmatprep.subr.mxu0 0.0
  %1070 = vmatpush1.msra.mxu0 0.0
  %1071 = vmatprep.subr.mxu0 0.0
  %1072 = vmatpush1.msra.mxu0 0.0
  %1073 = vmatprep.subr.mxu0 0.0
  %1074 = vmatpush1.msra.mxu0 0.0
  %1075 = vmatprep.mubr.f32.mxu0 0.0
  %1076 = vmatmul.mubr.f32.gmra.mrb[0].mxu0 %v351
  %v1077 = vpop.f32.mrb[0].mxu0
  %v1078 = vadd.f32 0.0, %v1077
  %v1079 = vpop.f32.mrb[0].mxu0
  %v1080 = vadd.f32 0.0, %v1079
  %1081 = vdwg.mxu0
  %v1082 = vadd.f32 %v977, %v1078
  %v1083 = vadd.f32 %v978, %v1080
  %v1084 = vld [vmem:[%s2 + $0x700] sm:$0xff]
  %v1085 = vld [vmem:[%s2 + $0x708] sm:$0xff]
  %v1086 = vld [vmem:[%s2 + $0x710] sm:$0xff]
  %v1087 = vld [vmem:[%s2 + $0x718] sm:$0xff]
  %v1088 = vld [vmem:[%s2 + $0x720] sm:$0xff]
  %v1089 = vld [vmem:[%s2 + $0x728] sm:$0xff]
  %v1090 = vld [vmem:[%s2 + $0x730] sm:$0xff]
  %v1091 = vld [vmem:[%s2 + $0x738] sm:$0xff]
  %v1092 = vld [vmem:[%s2 + $0x740] sm:$0xff]
  %v1093 = vld [vmem:[%s2 + $0x748] sm:$0xff]
  %v1094 = vld [vmem:[%s2 + $0x750] sm:$0xff]
  %v1095 = vld [vmem:[%s2 + $0x758] sm:$0xff]
  %v1096 = vld [vmem:[%s2 + $0x760] sm:$0xff]
  %v1097 = vld [vmem:[%s2 + $0x768] sm:$0xff]
  %v1098 = vld [vmem:[%s2 + $0x770] sm:$0xff]
  %v1099 = vld [vmem:[%s2 + $0x778] sm:$0xff]
  %v1100 = vld [vmem:[%s2 + $0x780] sm:$0xff]
  %v1101 = vld [vmem:[%s2 + $0x788] sm:$0xff]
  %v1102 = vld [vmem:[%s2 + $0x790] sm:$0xff]
  %v1103 = vld [vmem:[%s2 + $0x798] sm:$0xff]
  %v1104 = vld [vmem:[%s2 + $0x7a0] sm:$0xff]
  %v1105 = vld [vmem:[%s2 + $0x7a8] sm:$0xff]
  %v1106 = vld [vmem:[%s2 + $0x7b0] sm:$0xff]
  %v1107 = vld [vmem:[%s2 + $0x7b8] sm:$0xff]
  %v1108 = vld [vmem:[%s2 + $0x7c0] sm:$0xff]
  %v1109 = vld [vmem:[%s2 + $0x7c8] sm:$0xff]
  %v1110 = vld [vmem:[%s2 + $0x7d0] sm:$0xff]
  %v1111 = vld [vmem:[%s2 + $0x7d8] sm:$0xff]
  %v1112 = vld [vmem:[%s2 + $0x7e0] sm:$0xff]
  %v1113 = vld [vmem:[%s2 + $0x7e8] sm:$0xff]
  %v1114 = vld [vmem:[%s2 + $0x7f0] sm:$0xff]
  %v1115 = vld [vmem:[%s2 + $0x7f8] sm:$0xff]
  %1116 = vmatprep.subr.mxu0 %v1085
  %1117 = vmatpush1.msra.mxu0 %v1084
  %1118 = vmatprep.subr.mxu0 %v1087
  %1119 = vmatpush1.msra.mxu0 %v1086
  %1120 = vmatprep.subr.mxu0 %v1089
  %1121 = vmatpush1.msra.mxu0 %v1088
  %1122 = vmatprep.subr.mxu0 %v1091
  %1123 = vmatpush1.msra.mxu0 %v1090
  %1124 = vmatprep.subr.mxu0 %v1093
  %1125 = vmatpush1.msra.mxu0 %v1092
  %1126 = vmatprep.subr.mxu0 %v1095
  %1127 = vmatpush1.msra.mxu0 %v1094
  %1128 = vmatprep.subr.mxu0 %v1097
  %1129 = vmatpush1.msra.mxu0 %v1096
  %1130 = vmatprep.subr.mxu0 %v1099
  %1131 = vmatpush1.msra.mxu0 %v1098
  %1132 = vmatprep.subr.mxu0 %v1101
  %1133 = vmatpush1.msra.mxu0 %v1100
  %1134 = vmatprep.subr.mxu0 %v1103
  %1135 = vmatpush1.msra.mxu0 %v1102
  %1136 = vmatprep.subr.mxu0 %v1105
  %1137 = vmatpush1.msra.mxu0 %v1104
  %1138 = vmatprep.subr.mxu0 %v1107
  %1139 = vmatpush1.msra.mxu0 %v1106
  %1140 = vmatprep.subr.mxu0 %v1109
  %1141 = vmatpush1.msra.mxu0 %v1108
  %1142 = vmatprep.subr.mxu0 %v1111
  %1143 = vmatpush1.msra.mxu0 %v1110
  %1144 = vmatprep.subr.mxu0 %v1113
  %1145 = vmatpush1.msra.mxu0 %v1112
  %1146 = vmatprep.subr.mxu0 %v1115
  %1147 = vmatpush1.msra.mxu0 %v1114
  %1148 = vmatprep.subr.mxu0 0.0
  %1149 = vmatpush1.msra.mxu0 0.0
  %1150 = vmatprep.subr.mxu0 0.0
  %1151 = vmatpush1.msra.mxu0 0.0
  %1152 = vmatprep.subr.mxu0 0.0
  %1153 = vmatpush1.msra.mxu0 0.0
  %1154 = vmatprep.subr.mxu0 0.0
  %1155 = vmatpush1.msra.mxu0 0.0
  %1156 = vmatprep.subr.mxu0 0.0
  %1157 = vmatpush1.msra.mxu0 0.0
  %1158 = vmatprep.subr.mxu0 0.0
  %1159 = vmatpush1.msra.mxu0 0.0
  %1160 = vmatprep.subr.mxu0 0.0
  %1161 = vmatpush1.msra.mxu0 0.0
  %1162 = vmatprep.subr.mxu0 0.0
  %1163 = vmatpush1.msra.mxu0 0.0
  %1164 = vmatprep.subr.mxu0 0.0
  %1165 = vmatpush1.msra.mxu0 0.0
  %1166 = vmatprep.subr.mxu0 0.0
  %1167 = vmatpush1.msra.mxu0 0.0
  %1168 = vmatprep.subr.mxu0 0.0
  %1169 = vmatpush1.msra.mxu0 0.0
  %1170 = vmatprep.subr.mxu0 0.0
  %1171 = vmatpush1.msra.mxu0 0.0
  %1172 = vmatprep.subr.mxu0 0.0
  %1173 = vmatpush1.msra.mxu0 0.0
  %1174 = vmatprep.subr.mxu0 0.0
  %1175 = vmatpush1.msra.mxu0 0.0
  %1176 = vmatprep.subr.mxu0 0.0
  %1177 = vmatpush1.msra.mxu0 0.0
  %1178 = vmatprep.subr.mxu0 0.0
  %1179 = vmatpush1.msra.mxu0 0.0
  %1180 = vmatprep.mubr.f32.mxu0 0.0
  %1181 = vmatmul.mubr.f32.gmra.mrb[0].mxu0 %v352
  %v1182 = vpop.f32.mrb[0].mxu0
  %v1183 = vadd.f32 0.0, %v1182
  %v1184 = vpop.f32.mrb[0].mxu0
  %v1185 = vadd.f32 0.0, %v1184
  %1186 = vdwg.mxu0
  %v1187 = vadd.f32 %v1082, %v1183
  %v1188 = vadd.f32 %v1083, %v1185
  %v1189 = vlaneseq
  %v1190 = vshrl.u32 %v1189, 7
  %v1191 = vsub.s32 2, %v1190
  %v1192 = vrot.slane %v276, %v1191
  %v1193 = vlaneseq
  %v1194 = vshrl.u32 %v1193, 7
  %v1195 = vsub.s32 2, %v1194
  %v1196 = vrot.slane %v277, %v1195
  %v1197 = vadd.f32 %v1187, %v1192
  %v1198 = vadd.f32 %v1188, %v1196
  %v1199 = vmax.f32 %v1197, 0.0
  %v1200 = vmax.f32 %v1198, 0.0
  %v1201 = vld [vmem:[%s3] sm:$0xff]
  %v1202 = vld [vmem:[%s3 + $0x8] sm:$0xff]
  %v1203 = vld [vmem:[%s3 + $0x10] sm:$0xff]
  %v1204 = vld [vmem:[%s3 + $0x18] sm:$0xff]
  %v1205 = vld [vmem:[%s3 + $0x20] sm:$0xff]
  %v1206 = vld [vmem:[%s3 + $0x28] sm:$0xff]
  %v1207 = vld [vmem:[%s3 + $0x30] sm:$0xff]
  %v1208 = vld [vmem:[%s3 + $0x38] sm:$0xff]
  %v1209 = vld [vmem:[%s3 + $0x40] sm:$0xff]
  %v1210 = vld [vmem:[%s3 + $0x48] sm:$0xff]
  %v1211 = vld [vmem:[%s3 + $0x50] sm:$0xff]
  %v1212 = vld [vmem:[%s3 + $0x58] sm:$0xff]
  %v1213 = vld [vmem:[%s3 + $0x60] sm:$0xff]
  %v1214 = vld [vmem:[%s3 + $0x68] sm:$0xff]
  %v1215 = vld [vmem:[%s3 + $0x70] sm:$0xff]
  %v1216 = vld [vmem:[%s3 + $0x78] sm:$0xff]
  %v1217 = vld [vmem:[%s3 + $0x80] sm:$0xff]
  %v1218 = vld [vmem:[%s3 + $0x88] sm:$0xff]
  %v1219 = vld [vmem:[%s3 + $0x90] sm:$0xff]
  %v1220 = vld [vmem:[%s3 + $0x98] sm:$0xff]
  %v1221 = vld [vmem:[%s3 + $0xa0] sm:$0xff]
  %v1222 = vld [vmem:[%s3 + $0xa8] sm:$0xff]
  %v1223 = vld [vmem:[%s3 + $0xb0] sm:$0xff]
  %v1224 = vld [vmem:[%s3 + $0xb8] sm:$0xff]
  %v1225 = vld [vmem:[%s3 + $0xc0] sm:$0xff]
  %v1226 = vld [vmem:[%s3 + $0xc8] sm:$0xff]
  %v1227 = vld [vmem:[%s3 + $0xd0] sm:$0xff]
  %v1228 = vld [vmem:[%s3 + $0xd8] sm:$0xff]
  %v1229 = vld [vmem:[%s3 + $0xe0] sm:$0xff]
  %v1230 = vld [vmem:[%s3 + $0xe8] sm:$0xff]
  %v1231 = vld [vmem:[%s3 + $0xf0] sm:$0xff]
  %v1232 = vld [vmem:[%s3 + $0xf8] sm:$0xff]
  %v1233 = vlaneseq
  %v1234 = vshrl.u32 %v1233, 7
  %v1235 = vsub.s32 3, %v1234
  %v1236 = vrot.slane %v276, %v1235
  %1237 = vmatprep.subr.mxu0 0.0
  %1238 = vmatpush1.msra.mxu0 %v1201
  %1239 = vmatprep.subr.mxu0 0.0
  %1240 = vmatpush1.msra.mxu0 %v1202
  %1241 = vmatprep.subr.mxu0 0.0
  %1242 = vmatpush1.msra.mxu0 %v1203
  %1243 = vmatprep.subr.mxu0 0.0
  %1244 = vmatpush1.msra.mxu0 %v1204
  %1245 = vmatprep.subr.mxu0 0.0
  %1246 = vmatpush1.msra.mxu0 %v1205
  %1247 = vmatprep.subr.mxu0 0.0
  %1248 = vmatpush1.msra.mxu0 %v1206
  %1249 = vmatprep.subr.mxu0 0.0
  %1250 = vmatpush1.msra.mxu0 %v1207
  %1251 = vmatprep.subr.mxu0 0.0
  %1252 = vmatpush1.msra.mxu0 %v1208
  %1253 = vmatprep.subr.mxu0 0.0
  %1254 = vmatpush1.msra.mxu0 %v1209
  %1255 = vmatprep.subr.mxu0 0.0
  %1256 = vmatpush1.msra.mxu0 %v1210
  %1257 = vmatprep.subr.mxu0 0.0
  %1258 = vmatpush1.msra.mxu0 %v1211
  %1259 = vmatprep.subr.mxu0 0.0
  %1260 = vmatpush1.msra.mxu0 %v1212
  %1261 = vmatprep.subr.mxu0 0.0
  %1262 = vmatpush1.msra.mxu0 %v1213
  %1263 = vmatprep.subr.mxu0 0.0
  %1264 = vmatpush1.msra.mxu0 %v1214
  %1265 = vmatprep.subr.mxu0 0.0
  %1266 = vmatpush1.msra.mxu0 %v1215
  %1267 = vmatprep.subr.mxu0 0.0
  %1268 = vmatpush1.msra.mxu0 %v1216
  %1269 = vmatprep.subr.mxu0 0.0
  %1270 = vmatpush1.msra.mxu0 %v1217
  %1271 = vmatprep.subr.mxu0 0.0
  %1272 = vmatpush1.msra.mxu0 %v1218
  %1273 = vmatprep.subr.mxu0 0.0
  %1274 = vmatpush1.msra.mxu0 %v1219
  %1275 = vmatprep.subr.mxu0 0.0
  %1276 = vmatpush1.msra.mxu0 %v1220
  %1277 = vmatprep.subr.mxu0 0.0
  %1278 = vmatpush1.msra.mxu0 %v1221
  %1279 = vmatprep.subr.mxu0 0.0
  %1280 = vmatpush1.msra.mxu0 %v1222
  %1281 = vmatprep.subr.mxu0 0.0
  %1282 = vmatpush1.msra.mxu0 %v1223
  %1283 = vmatprep.subr.mxu0 0.0
  %1284 = vmatpush1.msra.mxu0 %v1224
  %1285 = vmatprep.subr.mxu0 0.0
  %1286 = vmatpush1.msra.mxu0 %v1225
  %1287 = vmatprep.subr.mxu0 0.0
  %1288 = vmatpush1.msra.mxu0 %v1226
  %1289 = vmatprep.subr.mxu0 0.0
  %1290 = vmatpush1.msra.mxu0 %v1227
  %1291 = vmatprep.subr.mxu0 0.0
  %1292 = vmatpush1.msra.mxu0 %v1228
  %1293 = vmatprep.subr.mxu0 0.0
  %1294 = vmatpush1.msra.mxu0 %v1229
  %1295 = vmatprep.subr.mxu0 0.0
  %1296 = vmatpush1.msra.mxu0 %v1230
  %1297 = vmatprep.subr.mxu0 0.0
  %1298 = vmatpush1.msra.mxu0 %v1231
  %1299 = vmatprep.subr.mxu0 0.0
  %1300 = vmatpush1.msra.mxu0 %v1232
  %1301 = vmatprep.mubr.f32.mxu0 %v1200
  %1302 = vmatmul.mubr.f32.gmra.mrb[0].mxu0 %v1199
  %v1303 = vpop.f32.mrb[0].mxu0
  %v1304 = vadd.f32 %v1236, %v1303
  %v1305 = vpop.f32.mrb[0].mxu0
  %1306 = vdwg.mxu0
  %v1307 = vmax.f32 %v1304, 0.0
  %v1308 = vld [vmem:[%s4] sm:$0xff]
  %v1309 = vld [vmem:[%s4 + $0x8] sm:$0xff]
  %v1310 = vld [vmem:[%s4 + $0x10] sm:$0xff]
  %v1311 = vld [vmem:[%s4 + $0x18] sm:$0xff]
  %v1312 = vld [vmem:[%s4 + $0x20] sm:$0xff]
  %v1313 = vld [vmem:[%s4 + $0x28] sm:$0xff]
  %v1314 = vld [vmem:[%s4 + $0x30] sm:$0xff]
  %v1315 = vld [vmem:[%s4 + $0x38] sm:$0xff]
  %v1316 = vld [vmem:[%s4 + $0x40] sm:$0xff]
  %v1317 = vld [vmem:[%s4 + $0x48] sm:$0xff]
  %v1318 = vld [vmem:[%s4 + $0x50] sm:$0xff]
  %v1319 = vld [vmem:[%s4 + $0x58] sm:$0xff]
  %v1320 = vld [vmem:[%s4 + $0x60] sm:$0xff]
  %v1321 = vld [vmem:[%s4 + $0x68] sm:$0xff]
  %v1322 = vld [vmem:[%s4 + $0x70] sm:$0xff]
  %v1323 = vld [vmem:[%s4 + $0x78] sm:$0xff]
  %v1324 = vlaneseq
  %v1325 = vshrl.u32 %v1324, 7
  %v1326 = vsub.s32 4, %v1325
  %v1327 = vrot.slane %v276, %v1326
  %1328 = vmatprep.subr.mxu0 0.0
  %1329 = vmatpush1.msra.mxu0 %v1308
  %1330 = vmatprep.subr.mxu0 0.0
  %1331 = vmatpush1.msra.mxu0 %v1309
  %1332 = vmatprep.subr.mxu0 0.0
  %1333 = vmatpush1.msra.mxu0 %v1310
  %1334 = vmatprep.subr.mxu0 0.0
  %1335 = vmatpush1.msra.mxu0 %v1311
  %1336 = vmatprep.subr.mxu0 0.0
  %1337 = vmatpush1.msra.mxu0 %v1312
  %1338 = vmatprep.subr.mxu0 0.0
  %1339 = vmatpush1.msra.mxu0 %v1313
  %1340 = vmatprep.subr.mxu0 0.0
  %1341 = vmatpush1.msra.mxu0 %v1314
  %1342 = vmatprep.subr.mxu0 0.0
  %1343 = vmatpush1.msra.mxu0 %v1315
  %1344 = vmatprep.subr.mxu0 0.0
  %1345 = vmatpush1.msra.mxu0 %v1316
  %1346 = vmatprep.subr.mxu0 0.0
  %1347 = vmatpush1.msra.mxu0 %v1317
  %1348 = vmatprep.subr.mxu0 0.0
  %1349 = vmatpush1.msra.mxu0 %v1318
  %1350 = vmatprep.subr.mxu0 0.0
  %1351 = vmatpush1.msra.mxu0 %v1319
  %1352 = vmatprep.subr.mxu0 0.0
  %1353 = vmatpush1.msra.mxu0 %v1320
  %1354 = vmatprep.subr.mxu0 0.0
  %1355 = vmatpush1.msra.mxu0 %v1321
  %1356 = vmatprep.subr.mxu0 0.0
  %1357 = vmatpush1.msra.mxu0 %v1322
  %1358 = vmatprep.subr.mxu0 0.0
  %1359 = vmatpush1.msra.mxu0 %v1323
  %1360 = vmatprep.subr.mxu0 0.0
  %1361 = vmatpush1.msra.mxu0 0.0
  %1362 = vmatprep.subr.mxu0 0.0
  %1363 = vmatpush1.msra.mxu0 0.0
  %1364 = vmatprep.subr.mxu0 0.0
  %1365 = vmatpush1.msra.mxu0 0.0
  %1366 = vmatprep.subr.mxu0 0.0
  %1367 = vmatpush1.msra.mxu0 0.0
  %1368 = vmatprep.subr.mxu0 0.0
  %1369 = vmatpush1.msra.mxu0 0.0
  %1370 = vmatprep.subr.mxu0 0.0
  %1371 = vmatpush1.msra.mxu0 0.0
  %1372 = vmatprep.subr.mxu0 0.0
  %1373 = vmatpush1.msra.mxu0 0.0
  %1374 = vmatprep.subr.mxu0 0.0
  %1375 = vmatpush1.msra.mxu0 0.0
  %1376 = vmatprep.subr.mxu0 0.0
  %1377 = vmatpush1.msra.mxu0 0.0
  %1378 = vmatprep.subr.mxu0 0.0
  %1379 = vmatpush1.msra.mxu0 0.0
  %1380 = vmatprep.subr.mxu0 0.0
  %1381 = vmatpush1.msra.mxu0 0.0
  %1382 = vmatprep.subr.mxu0 0.0
  %1383 = vmatpush1.msra.mxu0 0.0
  %1384 = vmatprep.subr.mxu0 0.0
  %1385 = vmatpush1.msra.mxu0 0.0
  %1386 = vmatprep.subr.mxu0 0.0
  %1387 = vmatpush1.msra.mxu0 0.0
  %1388 = vmatprep.subr.mxu0 0.0
  %1389 = vmatpush1.msra.mxu0 0.0
  %1390 = vmatprep.subr.mxu0 0.0
  %1391 = vmatpush1.msra.mxu0 0.0
  %1392 = vmatprep.mubr.f32.mxu0 0.0
  %1393 = vmatmul.mubr.f32.gmra.mrb[0].mxu0 %v1307
  %v1394 = vpop.f32.mrb[0].mxu0
  %v1395 = vadd.f32 %v1327, %v1394
  %v1396 = vpop.f32.mrb[0].mxu0
  %1397 = vdwg.mxu0
  %vm1398 = vcmask 64512
  %1399 = vst.msk [vmem:[%s6] sm:$0xff] %vm1398, %v1395
  // Predicated region
  $region26: #{forward.1} parent=0 // pred_check
    _
  $region27: #{forward.1} parent=0 // pred_check_branch
    %1401 = sbr.rel (0) target = $region29
  $region28: #{forward.1} parent=0 // pred_region
    _
  $region29: #{forward.1} parent=0 // pred_fallthru
    _
  // Predicated region
  $region30: #{forward.1} parent=0 // pred_check
    _
  $region31: #{forward.1} parent=0 // pred_check_branch
    %1403 = sbr.rel (0) target = $region33
  $region32: #{forward.1} parent=0 // pred_region
    _
  $region33: #{forward.1} parent=0 // pred_fallthru
    _

</llo_original>
